<compile_context>
chip_gen: v7x
topology: tpu7x:2x2x1
jax: 0.10.0
libtpu: 0.0.40
codegen_flags: <defaults>
</compile_context>

<pallas_src>
import jax
import jax.numpy as jnp
from jax.experimental import pallas as pl
from jax.experimental.pallas import tpu as pltpu

_LOG_EPS = -18.420680743952367  # log(1e-8)


# ----------------------------------------------------------------------------
# Shared per-step math (operates on plain jnp values inside a kernel body).
# g is the fused, bias-added pre-activation block (B, 6H) in the order
# [i | f | o | q | k | v]; the k columns of W are pre-scaled by 1/sqrt(H).
# ----------------------------------------------------------------------------
def _pla_step(g, c_prev, n_prev, m_prev, H):
    i_til = jnp.clip(g[:, 0 * H:1 * H], -100.0, 100.0)
    f_til = jnp.clip(g[:, 1 * H:2 * H], -100.0, 100.0)
    o_til = jnp.clip(g[:, 2 * H:3 * H], -100.0, 100.0)
    q_t = g[:, 3 * H:4 * H]
    k_t = g[:, 4 * H:5 * H]          # 1/sqrt(H) already folded into W_fused
    v_t = g[:, 5 * H:6 * H]

    i_t = jnp.exp(i_til)             # exp-space gate (kept, as in torch code)
    f_t = jax.nn.sigmoid(f_til)
    o_t = jax.nn.sigmoid(o_til)

    # m_t = max(log(max(f_t,1e-8)) + m, log(max(i_t,1e-8)))  -- rewritten:
    #   log(max(exp(i~),1e-8))     == max(i~, log 1e-8)
    #   log(max(sigmoid(f~),1e-8)) == max(log_sigmoid(f~), log 1e-8)
    log_i = jnp.maximum(i_til, _LOG_EPS)
    log_sig_f = jnp.minimum(f_til, 0.0) - jnp.log(1.0 + jnp.exp(-jnp.abs(f_til)))
    log_f = jnp.maximum(log_sig_f, _LOG_EPS)
    m_t = jnp.maximum(log_f + m_prev, log_i)

    # NOTE: exp-space i_t minus log-space m_t mirrors the PyTorch code exactly.
    i_prime = jnp.exp(jnp.minimum(i_t - m_t, 20.0))

    # C_t = f ⊙ C + i' ⊙ (v ⊗ k) ; fold i' into v before the outer product.
    c_t = f_t[:, :, None] * c_prev + (i_prime * v_t)[:, :, None] * k_t[:, None, :]
    n_t = f_t * n_prev + i_prime * k_t

    denom = jnp.maximum(jnp.abs(jnp.sum(n_t * q_t, axis=-1, keepdims=True)), 1.0)
    h_t = o_t * (jnp.sum(c_t * q_t[:, None, :], axis=-1)
                 * pl.reciprocal(denom, approx=True))
    return h_t, c_t, n_t, m_t


def _layernorm_project(x, lnw, lnb, w, b):
    mu = jnp.mean(x, axis=-1, keepdims=True)
    var = jnp.mean((x - mu) ** 2, axis=-1, keepdims=True)
    xn = (x - mu) * jax.lax.rsqrt(var + 1e-5)
    xn = xn * lnw + lnb
    # Single fused matmul + single full-width bias add.
    return jnp.dot(xn, w, preferred_element_type=jnp.float32) + b


# ----------------------------------------------------------------------------
# Kernel 1: single-step fused cell (matches plaCell.forward 1:1).
# ----------------------------------------------------------------------------
def pla_cell_kernel(x_ref, lnw_ref, lnb_ref, w_ref, b_ref, c_ref, n_ref, m_ref,
                    h_out, c_out, n_out, m_out):
    H = n_out.shape[-1]
    g = _layernorm_project(x_ref[...], lnw_ref[...], lnb_ref[...],
                           w_ref[...], b_ref[...])
    h_t, c_t, n_t, m_t = _pla_step(g, c_ref[...], n_ref[...], m_ref[...], H)
    h_out[...] = h_t
    c_out[...] = c_t
    n_out[...] = n_t
    m_out[...] = m_t


# ----------------------------------------------------------------------------
# Kernel 2a: LayerNorm + fused projection for the WHOLE sequence at once.
# ----------------------------------------------------------------------------
def pla_gates_kernel(x_ref, lnw_ref, lnb_ref, w_ref, b_ref, g_out):
    g_out[...] = _layernorm_project(x_ref[...], lnw_ref[...], lnb_ref[...],
                                    w_ref[...], b_ref[...])


# ----------------------------------------------------------------------------
# Kernel 2b: sequential recurrence over T; state lives in VMEM output blocks
# (constant index_map) for the whole grid and is written to HBM once.
# ----------------------------------------------------------------------------
def pla_recurrence_kernel(g_ref, c0_ref, n0_ref, m0_ref,
                          h_out, c_out, n_out, m_out):
    H = n_out.shape[-1]
    t = pl.program_id(0)

    @pl.when(t == 0)
    def _():
        c_out[...] = c0_ref[...]
        n_out[...] = n0_ref[...]
        m_out[...] = m0_ref[...]

    h_t, c_t, n_t, m_t = _pla_step(g_ref[0], c_out[...], n_out[...], m_out[...], H)
    h_out[0] = h_t
    c_out[...] = c_t
    n_out[...] = n_t
    m_out[...] = m_t


# ----------------------------------------------------------------------------
# Wrappers
# ----------------------------------------------------------------------------
def fuse_params(ln_w, ln_b, Ws, Bs):
    """Fuse 6 projections into one (D, 6H) matmul. Folds the 1/sqrt(H) scaling
    of W_k into the fused weight so a single full-width bias add is exact."""
    Wi, Wf, Wo, Wq, Wk, Wv = Ws
    Bi, Bf, Bo, Bq, Bk, Bv = Bs
    H = Wi.shape[1]
    D = ln_w.shape[0]
    inv_sqrt_h = 1.0 / jnp.sqrt(jnp.float32(H))
    W = jnp.concatenate([Wi, Wf, Wo, Wq, Wk * inv_sqrt_h, Wv], axis=1)
    B_ = jnp.concatenate([Bi, Bf, Bo, Bq, Bk, Bv], axis=0)
    return (ln_w.reshape(1, D).astype(jnp.float32),
            ln_b.reshape(1, D).astype(jnp.float32),
            W.astype(jnp.float32),
            B_.reshape(1, 6 * H).astype(jnp.float32))


def pla_cell(x, state, fused_params):
    """Single-step plaCell.forward. Returns (h_t, (C_t, n_t, m_t))."""
    lnw2, lnb2, W, B2 = fused_params
    C, n, m = state
    Bsz = x.shape[0]
    H = n.shape[-1]
    vmem = pl.BlockSpec(memory_space=pltpu.MemorySpace.VMEM)
    out_shape = (
        jax.ShapeDtypeStruct((Bsz, H), jnp.float32),
        jax.ShapeDtypeStruct((Bsz, H, H), jnp.float32),
        jax.ShapeDtypeStruct((Bsz, H), jnp.float32),
        jax.ShapeDtypeStruct((Bsz, H), jnp.float32),
    )
    h_t, C_t, n_t, m_t = pl.pallas_call(
        pla_cell_kernel,
        out_shape=out_shape,
        in_specs=[vmem] * 8,
        out_specs=(vmem,) * 4,
        # State updated in place: C -> C_t, n -> n_t, m -> m_t.
        input_output_aliases={5: 1, 6: 2, 7: 3},
    )(x, lnw2, lnb2, W, B2, C, n, m)
    return h_t, (C_t, n_t, m_t)


def pla_sequence(xs, state, fused_params):
    """Run the cell over xs: (T, B, D). Returns (h_seq (T,B,H), final state)."""
    lnw2, lnb2, W, B2 = fused_params
    C0, n0, m0 = state
    T, Bsz, D = xs.shape
    H = n0.shape[-1]
    SixH = W.shape[1]
    vmem = pl.BlockSpec(memory_space=pltpu.MemorySpace.VMEM)

    # Stage 1: gates for ALL timesteps with one MXU-friendly matmul.
    g = pl.pallas_call(
        pla_gates_kernel,
        out_shape=jax.ShapeDtypeStruct((T * Bsz, SixH), jnp.float32),
        in_specs=[vmem] * 5,
        out_specs=vmem,
    )(xs.reshape(T * Bsz, D), lnw2, lnb2, W, B2)
    g = g.reshape(T, Bsz, SixH)

    # Stage 2: elementwise recurrence only; state stays in VMEM across T steps.
    out_shape = (
        jax.ShapeDtypeStruct((T, Bsz, H), jnp.float32),
        jax.ShapeDtypeStruct((Bsz, H, H), jnp.float32),
        jax.ShapeDtypeStruct((Bsz, H), jnp.float32),
        jax.ShapeDtypeStruct((Bsz, H), jnp.float32),
    )
    h_seq, C_t, n_t, m_t = pl.pallas_call(
        pla_recurrence_kernel,
        out_shape=out_shape,
        grid_spec=pltpu.PrefetchScalarGridSpec(
            num_scalar_prefetch=0,
            grid=(T,),
            in_specs=[pl.BlockSpec((1, Bsz, SixH), lambda t: (t, 0, 0)),
                      pl.BlockSpec((Bsz, H, H), lambda t: (0, 0, 0)),
                      pl.BlockSpec((Bsz, H), lambda t: (0, 0)),
                      pl.BlockSpec((Bsz, H), lambda t: (0, 0))],
            out_specs=[pl.BlockSpec((1, Bsz, H), lambda t: (t, 0, 0)),
                       pl.BlockSpec((Bsz, H, H), lambda t: (0, 0, 0)),
                       pl.BlockSpec((Bsz, H), lambda t: (0, 0)),
                       pl.BlockSpec((Bsz, H), lambda t: (0, 0))]),
        compiler_params=pltpu.CompilerParams(
            dimension_semantics=("arbitrary",)),
    )(g, C0, n0, m0)
    return h_seq, (C_t, n_t, m_t)


# ----------------------------------------------------------------------------
# Plain-JAX reference (mirrors the PyTorch forward exactly) for validation.
# ----------------------------------------------------------------------------
def pla_cell_ref(x, state, ln_w, ln_b, Ws, Bs):
    C, n, m = state
    Wi, Wf, Wo, Wq, Wk, Wv = Ws
    Bi, Bf, Bo, Bq, Bk, Bv = Bs
    H = Wi.shape[1]
    mu = jnp.mean(x, axis=-1, keepdims=True)
    var = jnp.mean((x - mu) ** 2, axis=-1, keepdims=True)
    xn = (x - mu) / jnp.sqrt(var + 1e-5) * ln_w + ln_b
    i_tilda = jnp.clip(xn @ Wi + Bi, -100.0, 100.0)
    f_tilda = jnp.clip(xn @ Wf + Bf, -100.0, 100.0)
    o_tilda = jnp.clip(xn @ Wo + Bo, -100.0, 100.0)
    q_t = xn @ Wq + Bq
    k_t = (xn @ Wk) / jnp.sqrt(jnp.float32(H)) + Bk
    v_t = xn @ Wv + Bv
    i_t = jnp.exp(i_tilda)
    f_t = jax.nn.sigmoid(f_tilda)
    o_t = jax.nn.sigmoid(o_tilda)
    m_t = jnp.maximum(jnp.log(jnp.maximum(f_t, 1e-8)) + m,
                      jnp.log(jnp.maximum(i_t, 1e-8)))
    i_prime = jnp.exp(jnp.minimum(i_t - m_t, 20.0))
    C_t = f_t[..., None] * C + i_prime[..., None] * jnp.einsum('bi,bk->bik', v_t, k_t)
    n_t = f_t * n + i_prime * k_t
    normalize_inner = jnp.einsum('bh,bh->b', n_t, q_t)
    divisor = jnp.maximum(jnp.abs(normalize_inner), 1.0)
    h_tilda = jnp.einsum('bik,bk->bi', C_t, q_t) / divisor[:, None]
    return o_t * h_tilda, (C_t, n_t, m_t)


def _assert_close(name, got, want, tol):
    scale = jnp.maximum(jnp.max(jnp.abs(want)), 1.0)
    err = float(jnp.max(jnp.abs(got - want)) / scale)
    assert err < tol, f"{name}: rel-to-max error {err:.3e} exceeds {tol}"


if __name__ == "__main__":
    Bsz, D, H, T = 8, 32, 32, 8

    key = jax.random.PRNGKey(0)
    keys = jax.random.split(key, 14)
    kx, kxs, kC, kn, km, kb, klw, klb = keys[:8]
    kw = keys[8:]

    # Parameters (orthogonal weights as in reset_parameters; non-trivial
    # biases / LN affine to exercise every term of the forward pass).
    ortho = jax.nn.initializers.orthogonal()
    Ws = tuple(ortho(kw[i], (D, H), jnp.float32) for i in range(6))
    B_all = 0.05 * jax.random.normal(kb, (6, H), jnp.float32)
    Bs = tuple(B_all[i] for i in range(6))
    ln_w = 0.5 + 0.05 * jax.random.normal(klw, (D,), jnp.float32)
    ln_b = 0.05 * jax.random.normal(klb, (D,), jnp.float32)
    fused = fuse_params(ln_w, ln_b, Ws, Bs)

    # Inputs / initial state.
    x = jax.random.normal(kx, (Bsz, D), jnp.float32)
    xs = jax.random.normal(kxs, (T, Bsz, D), jnp.float32)
    C0 = 0.1 * jax.random.normal(kC, (Bsz, H, H), jnp.float32)
    n0 = 0.1 * jax.random.normal(kn, (Bsz, H), jnp.float32)
    m0 = 0.1 * jax.random.normal(km, (Bsz, H), jnp.float32)
    state = (C0, n0, m0)

    # --- Single-step cell (module forward semantics) -------------------------
    h_t, (C_t, n_t, m_t) = jax.jit(pla_cell)(x, state, fused)
    jax.block_until_ready((h_t, C_t, n_t, m_t))
    h_r, (C_r, n_r, m_r) = pla_cell_ref(x, state, ln_w, ln_b, Ws, Bs)
    _assert_close("h_t", h_t, h_r, 2e-3)   # approx reciprocal on readout
    _assert_close("C_t", C_t, C_r, 1e-4)
    _assert_close("n_t", n_t, n_r, 1e-4)
    _assert_close("m_t", m_t, m_r, 1e-4)

    # --- Sequence path (hoisted projection + fused time loop) ----------------
    h_seq, (C_T, n_T, m_T) = jax.jit(pla_sequence)(xs, state, fused)
    jax.block_until_ready((h_seq, C_T, n_T, m_T))

    def ref_scan_step(carry, x_t):
        h, carry = pla_cell_ref(x_t, carry, ln_w, ln_b, Ws, Bs)
        return carry, h

    (C_Tr, n_Tr, m_Tr), h_seq_r = jax.lax.scan(ref_scan_step, state, xs)
    _assert_close("h_seq", h_seq, h_seq_r, 2e-3)
    _assert_close("C_T", C_T, C_Tr, 1e-4)
    _assert_close("n_T", n_T, n_Tr, 1e-4)
    _assert_close("m_T", m_T, m_Tr, 1e-4)

    print("KERNEL_OK")
</pallas_src>

<mosaic_0001>
module attributes {stable_mosaic.version = 11 : i64} {
  func.func @pla_cell_kernel(%arg0: memref<8x32xf32, #tpu.memory_space<vmem>>, %arg1: memref<1x32xf32, #tpu.memory_space<vmem>>, %arg2: memref<1x32xf32, #tpu.memory_space<vmem>>, %arg3: memref<32x192xf32, #tpu.memory_space<vmem>>, %arg4: memref<1x192xf32, #tpu.memory_space<vmem>>, %arg5: memref<8x32x32xf32, #tpu.memory_space<vmem>>, %arg6: memref<8x32xf32, #tpu.memory_space<vmem>>, %arg7: memref<8x32xf32, #tpu.memory_space<vmem>>, %arg8: memref<8x32xf32, #tpu.memory_space<vmem>>, %arg9: memref<8x32x32xf32, #tpu.memory_space<vmem>>, %arg10: memref<8x32xf32, #tpu.memory_space<vmem>>, %arg11: memref<8x32xf32, #tpu.memory_space<vmem>>) attributes {dimension_semantics = [], scalar_prefetch = 0 : i64, scratch_operands = 0 : i64, tpu.core_type = #tpu.core_type<tc>} {
    %c0 = arith.constant 0 : index
    %c0_0 = arith.constant 0 : index
    %0 = vector.load %arg0[%c0, %c0_0] : memref<8x32xf32, #tpu.memory_space<vmem>>, vector<8x32xf32>
    %c0_1 = arith.constant 0 : index
    %c0_2 = arith.constant 0 : index
    %1 = vector.load %arg1[%c0_1, %c0_2] : memref<1x32xf32, #tpu.memory_space<vmem>>, vector<1x32xf32>
    %c0_3 = arith.constant 0 : index
    %c0_4 = arith.constant 0 : index
    %2 = vector.load %arg2[%c0_3, %c0_4] : memref<1x32xf32, #tpu.memory_space<vmem>>, vector<1x32xf32>
    %c0_5 = arith.constant 0 : index
    %c0_6 = arith.constant 0 : index
    %3 = vector.load %arg3[%c0_5, %c0_6] : memref<32x192xf32, #tpu.memory_space<vmem>>, vector<32x192xf32>
    %c0_7 = arith.constant 0 : index
    %c0_8 = arith.constant 0 : index
    %4 = vector.load %arg4[%c0_7, %c0_8] : memref<1x192xf32, #tpu.memory_space<vmem>>, vector<1x192xf32>
    %cst = arith.constant dense<0.000000e+00> : vector<8xf32>
    %5 = vector.multi_reduction <add>, %0, %cst [1] : vector<8x32xf32> to vector<8xf32>
    %6 = vector.shape_cast %5 : vector<8xf32> to vector<8x1xf32>
    %cst_9 = arith.constant 3.200000e+01 : f32
    %7 = vector.broadcast %cst_9 : f32 to vector<8x1xf32>
    %8 = arith.divf %6, %7 : vector<8x1xf32>
    %9 = vector.broadcast %8 : vector<8x1xf32> to vector<8x32xf32>
    %10 = arith.subf %0, %9 : vector<8x32xf32>
    %11 = arith.mulf %10, %10 : vector<8x32xf32>
    %cst_10 = arith.constant dense<0.000000e+00> : vector<8xf32>
    %12 = vector.multi_reduction <add>, %11, %cst_10 [1] : vector<8x32xf32> to vector<8xf32>
    %13 = vector.shape_cast %12 : vector<8xf32> to vector<8x1xf32>
    %cst_11 = arith.constant 3.200000e+01 : f32
    %14 = vector.broadcast %cst_11 : f32 to vector<8x1xf32>
    %15 = arith.divf %13, %14 : vector<8x1xf32>
    %16 = vector.broadcast %8 : vector<8x1xf32> to vector<8x32xf32>
    %17 = arith.subf %0, %16 : vector<8x32xf32>
    %cst_12 = arith.constant 9.99999974E-6 : f32
    %18 = vector.broadcast %cst_12 : f32 to vector<8x1xf32>
    %19 = arith.addf %15, %18 : vector<8x1xf32>
    %20 = math.rsqrt %19 : vector<8x1xf32>
    %21 = vector.broadcast %20 : vector<8x1xf32> to vector<8x32xf32>
    %22 = arith.mulf %17, %21 : vector<8x32xf32>
    %23 = vector.broadcast %1 : vector<1x32xf32> to vector<8x32xf32>
    %24 = arith.mulf %22, %23 : vector<8x32xf32>
    %25 = vector.broadcast %2 : vector<1x32xf32> to vector<8x32xf32>
    %26 = arith.addf %24, %25 : vector<8x32xf32>
    %cst_13 = arith.constant dense<0.000000e+00> : vector<8x192xf32>
    %27 = tpu.matmul %26, %3, %cst_13 {dimension_numbers = #tpu.dot_dimension_numbers<[1], [0], [0], [1], [0, 0, 1, 1], [], []>} : vector<8x32xf32>, vector<32x192xf32>, vector<8x192xf32> -> vector<8x192xf32>
    %28 = vector.broadcast %4 : vector<1x192xf32> to vector<8x192xf32>
    %29 = arith.addf %27, %28 : vector<8x192xf32>
    %c0_14 = arith.constant 0 : index
    %c0_15 = arith.constant 0 : index
    %c0_16 = arith.constant 0 : index
    %30 = vector.load %arg5[%c0_14, %c0_15, %c0_16] : memref<8x32x32xf32, #tpu.memory_space<vmem>>, vector<8x32x32xf32>
    %c0_17 = arith.constant 0 : index
    %c0_18 = arith.constant 0 : index
    %31 = vector.load %arg6[%c0_17, %c0_18] : memref<8x32xf32, #tpu.memory_space<vmem>>, vector<8x32xf32>
    %c0_19 = arith.constant 0 : index
    %c0_20 = arith.constant 0 : index
    %32 = vector.load %arg7[%c0_19, %c0_20] : memref<8x32xf32, #tpu.memory_space<vmem>>, vector<8x32xf32>
    %33 = vector.extract_strided_slice %29 {offsets = [0, 0], sizes = [8, 32], strides = [1, 1]} : vector<8x192xf32> to vector<8x32xf32>
    %cst_21 = arith.constant -1.000000e+02 : f32
    %cst_22 = arith.constant 1.000000e+02 : f32
    %34 = vector.broadcast %cst_21 : f32 to vector<8x32xf32>
    %35 = arith.maximumf %34, %33 : vector<8x32xf32>
    %36 = vector.broadcast %cst_22 : f32 to vector<8x32xf32>
    %37 = arith.minimumf %36, %35 : vector<8x32xf32>
    %38 = vector.extract_strided_slice %29 {offsets = [0, 32], sizes = [8, 32], strides = [1, 1]} : vector<8x192xf32> to vector<8x32xf32>
    %cst_23 = arith.constant -1.000000e+02 : f32
    %cst_24 = arith.constant 1.000000e+02 : f32
    %39 = vector.broadcast %cst_23 : f32 to vector<8x32xf32>
    %40 = arith.maximumf %39, %38 : vector<8x32xf32>
    %41 = vector.broadcast %cst_24 : f32 to vector<8x32xf32>
    %42 = arith.minimumf %41, %40 : vector<8x32xf32>
    %43 = vector.extract_strided_slice %29 {offsets = [0, 64], sizes = [8, 32], strides = [1, 1]} : vector<8x192xf32> to vector<8x32xf32>
    %cst_25 = arith.constant -1.000000e+02 : f32
    %cst_26 = arith.constant 1.000000e+02 : f32
    %44 = vector.broadcast %cst_25 : f32 to vector<8x32xf32>
    %45 = arith.maximumf %44, %43 : vector<8x32xf32>
    %46 = vector.broadcast %cst_26 : f32 to vector<8x32xf32>
    %47 = arith.minimumf %46, %45 : vector<8x32xf32>
    %48 = vector.extract_strided_slice %29 {offsets = [0, 96], sizes = [8, 32], strides = [1, 1]} : vector<8x192xf32> to vector<8x32xf32>
    %49 = vector.extract_strided_slice %29 {offsets = [0, 128], sizes = [8, 32], strides = [1, 1]} : vector<8x192xf32> to vector<8x32xf32>
    %50 = vector.extract_strided_slice %29 {offsets = [0, 160], sizes = [8, 32], strides = [1, 1]} : vector<8x192xf32> to vector<8x32xf32>
    %51 = math.exp %37 : vector<8x32xf32>
    %52 = arith.negf %42 : vector<8x32xf32>
    %53 = math.exp %52 : vector<8x32xf32>
    %cst_27 = arith.constant 1.000000e+00 : f32
    %54 = vector.broadcast %cst_27 : f32 to vector<8x32xf32>
    %55 = arith.addf %54, %53 : vector<8x32xf32>
    %56 = arith.divf %54, %55 : vector<8x32xf32>
    %57 = arith.negf %47 : vector<8x32xf32>
    %58 = math.exp %57 : vector<8x32xf32>
    %cst_28 = arith.constant 1.000000e+00 : f32
    %59 = vector.broadcast %cst_28 : f32 to vector<8x32xf32>
    %60 = arith.addf %59, %58 : vector<8x32xf32>
    %61 = arith.divf %59, %60 : vector<8x32xf32>
    %cst_29 = arith.constant -18.420681 : f32
    %62 = vector.broadcast %cst_29 : f32 to vector<8x32xf32>
    %63 = arith.maximumf %37, %62 : vector<8x32xf32>
    %cst_30 = arith.constant 0.000000e+00 : f32
    %64 = vector.broadcast %cst_30 : f32 to vector<8x32xf32>
    %65 = arith.minimumf %42, %64 : vector<8x32xf32>
    %66 = math.absf %42 : vector<8x32xf32>
    %cst_31 = arith.constant 0.000000e+00 : f32
    %67 = vector.broadcast %cst_31 : f32 to vector<8x32xf32>
    %68 = arith.subf %67, %66 : vector<8x32xf32>
    %69 = math.exp %68 : vector<8x32xf32>
    %cst_32 = arith.constant 1.000000e+00 : f32
    %70 = vector.broadcast %cst_32 : f32 to vector<8x32xf32>
    %71 = arith.addf %70, %69 : vector<8x32xf32>
    %72 = math.log %71 : vector<8x32xf32>
    %73 = arith.subf %65, %72 : vector<8x32xf32>
    %cst_33 = arith.constant -18.420681 : f32
    %74 = vector.broadcast %cst_33 : f32 to vector<8x32xf32>
    %75 = arith.maximumf %73, %74 : vector<8x32xf32>
    %76 = arith.addf %75, %32 : vector<8x32xf32>
    %77 = arith.maximumf %76, %63 : vector<8x32xf32>
    %78 = arith.subf %51, %77 : vector<8x32xf32>
    %cst_34 = arith.constant 2.000000e+01 : f32
    %79 = vector.broadcast %cst_34 : f32 to vector<8x32xf32>
    %80 = arith.minimumf %78, %79 : vector<8x32xf32>
    %81 = math.exp %80 : vector<8x32xf32>
    %82 = vector.shape_cast %56 : vector<8x32xf32> to vector<8x32x1xf32>
    %83 = vector.broadcast %82 : vector<8x32x1xf32> to vector<8x32x32xf32>
    %84 = arith.mulf %83, %30 : vector<8x32x32xf32>
    %85 = arith.mulf %81, %50 : vector<8x32xf32>
    %86 = vector.shape_cast %85 : vector<8x32xf32> to vector<8x32x1xf32>
    %87 = vector.shape_cast %49 : vector<8x32xf32> to vector<8x1x32xf32>
    %88 = vector.broadcast %86 : vector<8x32x1xf32> to vector<8x32x32xf32>
    %89 = vector.broadcast %87 : vector<8x1x32xf32> to vector<8x32x32xf32>
    %90 = arith.mulf %88, %89 : vector<8x32x32xf32>
    %91 = arith.addf %84, %90 : vector<8x32x32xf32>
    %92 = arith.mulf %56, %31 : vector<8x32xf32>
    %93 = arith.mulf %81, %49 : vector<8x32xf32>
    %94 = arith.addf %92, %93 : vector<8x32xf32>
    %95 = arith.mulf %94, %48 : vector<8x32xf32>
    %cst_35 = arith.constant dense<0.000000e+00> : vector<8xf32>
    %96 = vector.multi_reduction <add>, %95, %cst_35 [1] : vector<8x32xf32> to vector<8xf32>
    %97 = vector.shape_cast %96 : vector<8xf32> to vector<8x1xf32>
    %98 = math.absf %97 : vector<8x1xf32>
    %cst_36 = arith.constant 1.000000e+00 : f32
    %99 = vector.broadcast %cst_36 : f32 to vector<8x1xf32>
    %100 = arith.maximumf %98, %99 : vector<8x1xf32>
    %101 = vector.shape_cast %48 : vector<8x32xf32> to vector<8x1x32xf32>
    %102 = vector.broadcast %101 : vector<8x1x32xf32> to vector<8x32x32xf32>
    %103 = arith.mulf %91, %102 : vector<8x32x32xf32>
    %cst_37 = arith.constant dense<0.000000e+00> : vector<8x32xf32>
    %104 = vector.multi_reduction <add>, %103, %cst_37 [2] : vector<8x32x32xf32> to vector<8x32xf32>
    %105 = tpu.reciprocal %100 {approx = true} : vector<8x1xf32> -> vector<8x1xf32>
    %106 = vector.broadcast %105 : vector<8x1xf32> to vector<8x32xf32>
    %107 = arith.mulf %104, %106 : vector<8x32xf32>
    %108 = arith.mulf %61, %107 : vector<8x32xf32>
    %c0_38 = arith.constant 0 : index
    %c0_39 = arith.constant 0 : index
    %109 = vector.load %arg8[%c0_38, %c0_39] : memref<8x32xf32, #tpu.memory_space<vmem>>, vector<8x32xf32>
    tpu.vector_store %arg8[%c0_38, %c0_39], %108 {strides = array<i32>} : memref<8x32xf32, #tpu.memory_space<vmem>>, vector<8x32xf32>,
    %c0_40 = arith.constant 0 : index
    %c0_41 = arith.constant 0 : index
    %c0_42 = arith.constant 0 : index
    %110 = vector.load %arg9[%c0_40, %c0_41, %c0_42] : memref<8x32x32xf32, #tpu.memory_space<vmem>>, vector<8x32x32xf32>
    tpu.vector_store %arg9[%c0_40, %c0_41, %c0_42], %91 {strides = array<i32>} : memref<8x32x32xf32, #tpu.memory_space<vmem>>, vector<8x32x32xf32>,
    %c0_43 = arith.constant 0 : index
    %c0_44 = arith.constant 0 : index
    %111 = vector.load %arg10[%c0_43, %c0_44] : memref<8x32xf32, #tpu.memory_space<vmem>>, vector<8x32xf32>
    tpu.vector_store %arg10[%c0_43, %c0_44], %94 {strides = array<i32>} : memref<8x32xf32, #tpu.memory_space<vmem>>, vector<8x32xf32>,
    %c0_45 = arith.constant 0 : index
    %c0_46 = arith.constant 0 : index
    %112 = vector.load %arg11[%c0_45, %c0_46] : memref<8x32xf32, #tpu.memory_space<vmem>>, vector<8x32xf32>
    tpu.vector_store %arg11[%c0_45, %c0_46], %77 {strides = array<i32>} : memref<8x32xf32, #tpu.memory_space<vmem>>, vector<8x32xf32>,
    return
  }
}

</mosaic_0001>

<llo_original>
// kernel: pla_cell.1
$region0: #{pla_cell.1}
  #allocation0 [shape = 'u32[]', space=smem, size = 0x4, offset = 0x4, fixed_abs, tag = 'smem constant byte address 0x4 - core index']
  #allocation1 [shape = 'u32[144,128]{1,0:T(1,128)}', space=vmem, size = 0x12000, scoped, tag = 'internal scratch']
  %s0 = inlined_call_operand.vmem [shape: f32[8,32], index: 0, kind: input, shape index: {}]
  %s1 = inlined_call_operand.vmem [shape: f32[1,32], index: 1, kind: input, shape index: {}]
  %s2 = inlined_call_operand.vmem [shape: f32[1,32], index: 2, kind: input, shape index: {}]
  %s3 = inlined_call_operand.vmem [shape: f32[32,192], index: 3, kind: input, shape index: {}]
  %s4 = inlined_call_operand.vmem [shape: f32[1,192], index: 4, kind: input, shape index: {}]
  %s5 = inlined_call_operand.hbm [shape: f32[8,32,32], index: 5, kind: input, shape index: {}, may-alias: {5,9}]
  %s6 = inlined_call_operand.hbm [shape: f32[8,32], index: 6, kind: input, shape index: {}, may-alias: {6,10}]
  %s7 = inlined_call_operand.hbm [shape: f32[8,32], index: 7, kind: input, shape index: {}, may-alias: {7,11}]
  %s8 = inlined_call_operand.hbm [shape: f32[8,32], index: 8, kind: output, shape index: {0}]
  %s9 = inlined_call_operand.hbm [shape: f32[8,32,32], index: 9, kind: output, shape index: {1}, may-alias: {5,9}]
  %s10 = inlined_call_operand.hbm [shape: f32[8,32], index: 10, kind: output, shape index: {2}, may-alias: {6,10}]
  %s11 = inlined_call_operand.hbm [shape: f32[8,32], index: 11, kind: output, shape index: {3}, may-alias: {7,11}]
  %12 = xla_tuple %s8, %s9, %s10, %s11
  %s13 = sld [smem:[#allocation0]]
  $region78: #{pla_cell.1} parent=0
    _
  %s15 = ssub.s32 1, %s13
  %s16 = scalar_select 0, %s15, %s13
  $region1: #{pla_cell.1} parent=0
    #allocation2 [shape = 'u8[131072]{0}', space=vmem, size = 0x20000, scoped, tag = 'input window, operand 5, single buffered']
    #allocation3 [shape = 's32[1]{0}', space=sflag, size = 0x4, scoped, tag = 'scoped memory for pla_cell.1']
    #allocation4 [shape = 's32[1]{0}', space=sflag, size = 0x4, scoped, tag = 'scoped memory for pla_cell.1']
    #allocation5 [shape = 'u8[4096]{0}', space=vmem, size = 0x1000, scoped, tag = 'input window, operand 6, single buffered']
    #allocation6 [shape = 's32[1]{0}', space=sflag, size = 0x4, scoped, tag = 'scoped memory for pla_cell.1']
    #allocation7 [shape = 'u8[4096]{0}', space=vmem, size = 0x1000, scoped, tag = 'input window, operand 7, single buffered']
    #allocation8 [shape = 'u8[4096]{0}', space=vmem, size = 0x1000, scoped, tag = 'output window, operand 0, single buffered']
    #allocation9 [shape = 'u8[131072]{0}', space=vmem, size = 0x20000, scoped, tag = 'output window, operand 1, single buffered']
    #allocation10 [shape = 's32[1]{0}', space=sflag, size = 0x4, scoped, tag = 'scoped memory for pla_cell.1']
    #allocation11 [shape = 'u8[4096]{0}', space=vmem, size = 0x1000, scoped, tag = 'output window, operand 2, single buffered']
    #allocation12 [shape = 'u8[4096]{0}', space=vmem, size = 0x1000, scoped, tag = 'output window, operand 3, single buffered']
    #allocation13 [shape = 's32[1]{0}', space=sflag, size = 0x4, scoped, tag = 'scoped memory for pla_cell.1']
    %17 = vsyncpa [#allocation3], 0
    %18 = vsyncpa [#allocation6], 0
    %19 = vsyncpa [#allocation4], 0
    %20 = vsyncpa [#allocation10], 0
    %21 = vsyncpa [#allocation13], 0
    // Predicated region
    $region2: #{pla_cell.1} parent=1 // pred_check
      _
    $region3: #{pla_cell.1} parent=1 // pred_check_branch
      %23 = sbr.rel (0) target = $region5
    $region4: #{pla_cell.1} parent=1 // pred_region
      _
    $region5: #{pla_cell.1} parent=1 // pred_fallthru
      _
    // Predicated region
    $region6: #{pla_cell.1} parent=1 // pred_check
      _
    $region7: #{pla_cell.1} parent=1 // pred_check_branch
      %25 = sbr.rel (0) target = $region9
    $region8: #{pla_cell.1} parent=1 // pred_region
      _
    $region9: #{pla_cell.1} parent=1 // pred_fallthru
      _
    // Predicated region
    $region10: #{pla_cell.1} parent=1 // pred_check
      _
    $region11: #{pla_cell.1} parent=1 // pred_check_branch
      %27 = sbr.rel (0) target = $region13
    $region12: #{pla_cell.1} parent=1 // pred_region
      _
    $region13: #{pla_cell.1} parent=1 // pred_fallthru
      _
    // Predicated region
    $region14: #{pla_cell.1} parent=1 // pred_check
      _
    $region15: #{pla_cell.1} parent=1 // pred_check_branch
      %29 = sbr.rel (0) target = $region17
    $region16: #{pla_cell.1} parent=1 // pred_region
      _
    $region17: #{pla_cell.1} parent=1 // pred_fallthru
      _
    // Predicated region
    $region18: #{pla_cell.1} parent=1 // pred_check
      _
    $region19: #{pla_cell.1} parent=1 // pred_check_branch
      %31 = sbr.rel (0) target = $region21
    $region20: #{pla_cell.1} parent=1 // pred_region
      _
    $region21: #{pla_cell.1} parent=1 // pred_fallthru
      _
    // Predicated region
    $region22: #{pla_cell.1} parent=1 // pred_check
      _
    $region23: #{pla_cell.1} parent=1 // pred_check_branch
      %33 = sbr.rel (0) target = $region25
    $region24: #{pla_cell.1} parent=1 // pred_region
      %s35 = ssub.s32 4096, 4096
      %36 = vsyncadd [#allocation3], %s35
      %s37 = sshll.u32 [#allocation2], 4
      %s38 = int_to_ptr.vmem [resolvable:$true] %s37
      %43 = dma.hbm_to_vmem [thread:$0]  %s5, 4096, %s38, [#allocation3], 128, 128, 8
    $region25: #{pla_cell.1} parent=1 // pred_fallthru
      _
    // Predicated region
    $region26: #{pla_cell.1} parent=1 // pred_check
      _
    $region27: #{pla_cell.1} parent=1 // pred_check_branch
      %45 = sbr.rel (0) target = $region29
    $region28: #{pla_cell.1} parent=1 // pred_region
      %s47 = ssub.s32 128, 128
      %48 = vsyncadd [#allocation6], %s47
      %s50 = sshll.u32 [#allocation5], 4
      %s51 = int_to_ptr.vmem [resolvable:$true] %s50
      %53 = dma.hbm_to_vmem [thread:$0]  %s6, 128, %s51, [#allocation6]
    $region29: #{pla_cell.1} parent=1 // pred_fallthru
      _
    // Predicated region
    $region30: #{pla_cell.1} parent=1 // pred_check
      _
    $region31: #{pla_cell.1} parent=1 // pred_check_branch
      %55 = sbr.rel (0) target = $region33
    $region32: #{pla_cell.1} parent=1 // pred_region
      %s57 = ssub.s32 128, 128
      %58 = vsyncadd [#allocation6], %s57
      %s60 = sshll.u32 [#allocation7], 4
      %s61 = int_to_ptr.vmem [resolvable:$true] %s60
      %63 = dma.hbm_to_vmem [thread:$0]  %s7, 128, %s61, [#allocation6]
    $region33: #{pla_cell.1} parent=1 // pred_fallthru
      _
    // Predicated region
    $region34: #{pla_cell.1} parent=1 // pred_check
      _
    $region35: #{pla_cell.1} parent=1 // pred_check_branch
      %65 = sbr.rel (0) target = $region37
    $region36: #{pla_cell.1} parent=1 // pred_region
      %66 = dma.done [#allocation3], 4096
    $region37: #{pla_cell.1} parent=1 // pred_fallthru
      _
    // Predicated region
    $region38: #{pla_cell.1} parent=1 // pred_check
      _
    $region39: #{pla_cell.1} parent=1 // pred_check_branch
      %68 = sbr.rel (0) target = $region41
    $region40: #{pla_cell.1} parent=1 // pred_region
      %69 = dma.done [#allocation6], 128
    $region41: #{pla_cell.1} parent=1 // pred_fallthru
      _
    // Predicated region
    $region42: #{pla_cell.1} parent=1 // pred_check
      _
    $region43: #{pla_cell.1} parent=1 // pred_check_branch
      %71 = sbr.rel (0) target = $region45
    $region44: #{pla_cell.1} parent=1 // pred_region
      %72 = dma.done [#allocation6], 128
    $region45: #{pla_cell.1} parent=1 // pred_fallthru
      _
    %v73 = vld [vmem:[%s0] sm:$0xff]
    %v74 = vld [vmem:[%s1] sm:$0x1]
    %v75 = vld [vmem:[%s2] sm:$0x1]
    %v76 = vld [vmem:[%s3] sm:$0xff]
    %v77 = vld [vmem:[%s3 + $0x8] sm:$0xff]
    %v78 = vld [vmem:[%s3 + $0x10] sm:$0xff]
    %v79 = vld [vmem:[%s3 + $0x18] sm:$0xff]
    %v80 = vld [vmem:[%s3 + $0x20] sm:$0xff]
    %v81 = vld [vmem:[%s3 + $0x28] sm:$0xff]
    %v82 = vld [vmem:[%s3 + $0x30] sm:$0xff]
    %v83 = vld [vmem:[%s3 + $0x38] sm:$0xff]
    %v84 = vld [vmem:[%s4] sm:$0x3]
    %vm85 = vcmask 261120
    %v86 = vsel %vm85, %v73, 0.0
    %87 = vadd.xlane.f32.xlu0 %v86
    %v88 = vpop.xlane.xlu0 %87
    %v89 = vrcp.pop 32.0
    %v90 = vmul.f32 %v88, %v89
    %v91 = vsub.f32 %v73, %v90
    %v92 = vmul.f32 %v91, %v91
    %v93 = vsel %vm85, %v92, 0.0
    %94 = vadd.xlane.f32.xlu0 %v93
    %v95 = vpop.xlane.xlu0 %94
    %v96 = vmul.f32 %v95, %v89
    %v97 = vadd.f32 %v96, 1e-05
    %v98 = vrsqrt.pop %v97
    %v99 = vmul.f32 %v91, %v98
    %v101 = vlaneseq
    %v102 = vshrl.u32 %v101, 7
    %v103 = vsub.s32 0, %v102
    %v104 = vrot.slane %v74, %v103
    %v106 = vmul.f32 %v99, %v104
    %v108 = vlaneseq
    %v109 = vshrl.u32 %v108, 7
    %v110 = vsub.s32 0, %v109
    %v111 = vrot.slane %v75, %v110
    %v113 = vadd.f32 %v106, %v111
    %v115 = vlaneseq
    %v116 = vshrl.u32 %v115, 7
    %v117 = vsub.s32 0, %v116
    %v118 = vrot.slane %v84, %v117
    %v119 = vlaneseq
    %v120 = vshrl.u32 %v119, 7
    %v121 = vsub.s32 1, %v120
    %v122 = vrot.slane %v84, %v121
    %v126 = vsel %vm85, %v113, 0
    %128 = vmatprep.subr.mxu0 %v77
    %129 = vmatpush1.msra.mxu0 %v76
    %130 = vmatprep.subr.mxu0 %v79
    %131 = vmatpush1.msra.mxu0 %v78
    %132 = vmatprep.subr.mxu0 %v81
    %133 = vmatpush1.msra.mxu0 %v80
    %134 = vmatprep.subr.mxu0 %v83
    %135 = vmatpush1.msra.mxu0 %v82
    %136 = vmatprep.subr.mxu0 0.0
    %137 = vmatpush1.msra.mxu0 0.0
    %138 = vmatprep.subr.mxu0 0.0
    %139 = vmatpush1.msra.mxu0 0.0
    %140 = vmatprep.subr.mxu0 0.0
    %141 = vmatpush1.msra.mxu0 0.0
    %142 = vmatprep.subr.mxu0 0.0
    %143 = vmatpush1.msra.mxu0 0.0
    %144 = vmatprep.subr.mxu0 0.0
    %145 = vmatpush1.msra.mxu0 0.0
    %146 = vmatprep.subr.mxu0 0.0
    %147 = vmatpush1.msra.mxu0 0.0
    %148 = vmatprep.subr.mxu0 0.0
    %149 = vmatpush1.msra.mxu0 0.0
    %150 = vmatprep.subr.mxu0 0.0
    %151 = vmatpush1.msra.mxu0 0.0
    %152 = vmatprep.subr.mxu0 0.0
    %153 = vmatpush1.msra.mxu0 0.0
    %154 = vmatprep.subr.mxu0 0.0
    %155 = vmatpush1.msra.mxu0 0.0
    %156 = vmatprep.subr.mxu0 0.0
    %157 = vmatpush1.msra.mxu0 0.0
    %158 = vmatprep.subr.mxu0 0.0
    %159 = vmatpush1.msra.mxu0 0.0
    %160 = vmatprep.subr.mxu0 0.0
    %161 = vmatpush1.msra.mxu0 0.0
    %162 = vmatprep.subr.mxu0 0.0
    %163 = vmatpush1.msra.mxu0 0.0
    %164 = vmatprep.subr.mxu0 0.0
    %165 = vmatpush1.msra.mxu0 0.0
    %166 = vmatprep.subr.mxu0 0.0
    %167 = vmatpush1.msra.mxu0 0.0
    %168 = vmatprep.subr.mxu0 0.0
    %169 = vmatpush1.msra.mxu0 0.0
    %170 = vmatprep.subr.mxu0 0.0
    %171 = vmatpush1.msra.mxu0 0.0
    %172 = vmatprep.subr.mxu0 0.0
    %173 = vmatpush1.msra.mxu0 0.0
    %174 = vmatprep.subr.mxu0 0.0
    %175 = vmatpush1.msra.mxu0 0.0
    %176 = vmatprep.subr.mxu0 0.0
    %177 = vmatpush1.msra.mxu0 0.0
    %178 = vmatprep.subr.mxu0 0.0
    %179 = vmatpush1.msra.mxu0 0.0
    %180 = vmatprep.subr.mxu0 0.0
    %181 = vmatpush1.msra.mxu0 0.0
    %182 = vmatprep.subr.mxu0 0.0
    %183 = vmatpush1.msra.mxu0 0.0
    %184 = vmatprep.subr.mxu0 0.0
    %185 = vmatpush1.msra.mxu0 0.0
    %186 = vmatprep.subr.mxu0 0.0
    %187 = vmatpush1.msra.mxu0 0.0
    %188 = vmatprep.subr.mxu0 0.0
    %189 = vmatpush1.msra.mxu0 0.0
    %190 = vmatprep.subr.mxu0 0.0
    %191 = vmatpush1.msra.mxu0 0.0
    %192 = vmatprep.mubr.f32.mxu0 0.0
    %193 = vmatmul.mubr.f32.gmra.mrb[0].mxu0 %v126
    %v194 = vpop.f32.mrb[0].mxu0
    %v195 = vadd.f32 %v118, %v194
    %v196 = vpop.f32.mrb[0].mxu0
    %v197 = vadd.f32 %v122, %v196
    %198 = vdwg.mxu0
    %v199 = vld [vmem:[#allocation2] sm:$0xff]
    %v200 = vld [vmem:[#allocation2 + $0x8] sm:$0xff]
    %v201 = vld [vmem:[#allocation2 + $0x10] sm:$0xff]
    %v202 = vld [vmem:[#allocation2 + $0x18] sm:$0xff]
    %v203 = vld [vmem:[#allocation2 + $0x20] sm:$0xff]
    %v204 = vld [vmem:[#allocation2 + $0x28] sm:$0xff]
    %v205 = vld [vmem:[#allocation2 + $0x30] sm:$0xff]
    %v206 = vld [vmem:[#allocation2 + $0x38] sm:$0xff]
    %v207 = vld [vmem:[#allocation2 + $0x40] sm:$0xff]
    %v208 = vld [vmem:[#allocation2 + $0x48] sm:$0xff]
    %v209 = vld [vmem:[#allocation2 + $0x50] sm:$0xff]
    %v210 = vld [vmem:[#allocation2 + $0x58] sm:$0xff]
    %v211 = vld [vmem:[#allocation2 + $0x60] sm:$0xff]
    %v212 = vld [vmem:[#allocation2 + $0x68] sm:$0xff]
    %v213 = vld [vmem:[#allocation2 + $0x70] sm:$0xff]
    %v214 = vld [vmem:[#allocation2 + $0x78] sm:$0xff]
    %v215 = vld [vmem:[#allocation2 + $0x80] sm:$0xff]
    %v216 = vld [vmem:[#allocation2 + $0x88] sm:$0xff]
    %v217 = vld [vmem:[#allocation2 + $0x90] sm:$0xff]
    %v218 = vld [vmem:[#allocation2 + $0x98] sm:$0xff]
    %v219 = vld [vmem:[#allocation2 + $0xa0] sm:$0xff]
    %v220 = vld [vmem:[#allocation2 + $0xa8] sm:$0xff]
    %v221 = vld [vmem:[#allocation2 + $0xb0] sm:$0xff]
    %v222 = vld [vmem:[#allocation2 + $0xb8] sm:$0xff]
    %v223 = vld [vmem:[#allocation2 + $0xc0] sm:$0xff]
    %v224 = vld [vmem:[#allocation2 + $0xc8] sm:$0xff]
    %v225 = vld [vmem:[#allocation2 + $0xd0] sm:$0xff]
    %v226 = vld [vmem:[#allocation2 + $0xd8] sm:$0xff]
    %v227 = vld [vmem:[#allocation2 + $0xe0] sm:$0xff]
    %v228 = vld [vmem:[#allocation2 + $0xe8] sm:$0xff]
    %v229 = vld [vmem:[#allocation2 + $0xf0] sm:$0xff]
    %v230 = vld [vmem:[#allocation2 + $0xf8] sm:$0xff]
    %v231 = vld [vmem:[#allocation5] sm:$0xff]
    %v232 = vld [vmem:[#allocation7] sm:$0xff]
    %v233 = vmax.f32 %v195, -100.0
    %v234 = vmin.f32 %v233, 100.0
    %v235 = vmul.f32 %v234, 1.442695
    %v236 = vpow.pop %v235
    %v237 = vxor.u32 %v234, 2147483648
    %v238 = vmul.f32 %v237, 1.442695
    %v239 = vpow.pop %v238
    %v240 = vadd.f32 %v239, 1.0
    %v241 = vrcp.pop %v240
    %v242 = vmul.f32 1.0, %v241
    %v243 = vmax.f32 %v234, -18.420681
    %v244 = vmin.f32 %v234, 0.0
    %v245 = vand.u32 2147483647, %v234
    %v246 = vsub.f32 0.0, %v245
    %v247 = vmul.f32 %v246, 1.442695
    %v248 = vpow.pop %v247
    %v249 = vadd.f32 %v248, 1.0
    %v250 = vlog2.pop %v249
    %v251 = vmul.f32 %v250, 0.6931472
    %v252 = vsub.f32 %v244, %v251
    %v253 = vmax.f32 %v252, -18.420681
    %255 = vrot.lane.b32.xlu0 %v232, 32
    %v256 = vpop.permute.xlu0 %255
    %v258 = vadd.f32 %v253, %v256
    %260 = vrot.lane.b32.xlu0 %v243, 32
    %v261 = vpop.permute.xlu0 %260
    %v263 = vmax.f32 %v258, %v261
    %265 = vrot.lane.b32.xlu0 %v263, 96
    %v266 = vpop.permute.xlu0 %265
    %v268 = vsub.f32 %v236, %v266
    %v269 = vmin.f32 %v268, 20.0
    %v270 = vmul.f32 %v269, 1.442695
    %v271 = vpow.pop %v270
    %v272 = vlaneseq
    %v273 = vshrl.u32 %v272, 7
    %v274 = vsub.s32 0, %v273
    %v275 = vrot.slane %v242, %v274
    %s277 = sor.u32 256, 32
    %278 = vbcast.lane.b32.xlu0 %v275, %s277
    %v279 = vpop.permute.xlu0 %278
    %s281 = sor.u32 256, 40
    %282 = vbcast.lane.b32.xlu0 %v275, %s281
    %v283 = vpop.permute.xlu0 %282
    %s285 = sor.u32 256, 48
    %286 = vbcast.lane.b32.xlu0 %v275, %s285
    %v287 = vpop.permute.xlu0 %286
    %s289 = sor.u32 256, 56
    %290 = vbcast.lane.b32.xlu0 %v275, %s289
    %v291 = vpop.permute.xlu0 %290
    %v292 = vlaneseq
    %v293 = vshrl.u32 %v292, 7
    %v294 = vsub.s32 1, %v293
    %v295 = vrot.slane %v242, %v294
    %s297 = sor.u32 256, 32
    %298 = vbcast.lane.b32.xlu0 %v295, %s297
    %v299 = vpop.permute.xlu0 %298
    %s301 = sor.u32 256, 40
    %302 = vbcast.lane.b32.xlu0 %v295, %s301
    %v303 = vpop.permute.xlu0 %302
    %s305 = sor.u32 256, 48
    %306 = vbcast.lane.b32.xlu0 %v295, %s305
    %v307 = vpop.permute.xlu0 %306
    %s309 = sor.u32 256, 56
    %310 = vbcast.lane.b32.xlu0 %v295, %s309
    %v311 = vpop.permute.xlu0 %310
    %v312 = vlaneseq
    %v313 = vshrl.u32 %v312, 7
    %v314 = vsub.s32 2, %v313
    %v315 = vrot.slane %v242, %v314
    %s317 = sor.u32 256, 32
    %318 = vbcast.lane.b32.xlu0 %v315, %s317
    %v319 = vpop.permute.xlu0 %318
    %s321 = sor.u32 256, 40
    %322 = vbcast.lane.b32.xlu0 %v315, %s321
    %v323 = vpop.permute.xlu0 %322
    %s325 = sor.u32 256, 48
    %326 = vbcast.lane.b32.xlu0 %v315, %s325
    %v327 = vpop.permute.xlu0 %326
    %s329 = sor.u32 256, 56
    %330 = vbcast.lane.b32.xlu0 %v315, %s329
    %v331 = vpop.permute.xlu0 %330
    %v332 = vlaneseq
    %v333 = vshrl.u32 %v332, 7
    %v334 = vsub.s32 3, %v333
    %v335 = vrot.slane %v242, %v334
    %s337 = sor.u32 256, 32
    %338 = vbcast.lane.b32.xlu0 %v335, %s337
    %v339 = vpop.permute.xlu0 %338
    %s341 = sor.u32 256, 40
    %342 = vbcast.lane.b32.xlu0 %v335, %s341
    %v343 = vpop.permute.xlu0 %342
    %s345 = sor.u32 256, 48
    %346 = vbcast.lane.b32.xlu0 %v335, %s345
    %v347 = vpop.permute.xlu0 %346
    %s349 = sor.u32 256, 56
    %350 = vbcast.lane.b32.xlu0 %v335, %s349
    %v351 = vpop.permute.xlu0 %350
    %v352 = vlaneseq
    %v353 = vshrl.u32 %v352, 7
    %v354 = vsub.s32 4, %v353
    %v355 = vrot.slane %v242, %v354
    %s357 = sor.u32 256, 32
    %358 = vbcast.lane.b32.xlu0 %v355, %s357
    %v359 = vpop.permute.xlu0 %358
    %s361 = sor.u32 256, 40
    %362 = vbcast.lane.b32.xlu0 %v355, %s361
    %v363 = vpop.permute.xlu0 %362
    %s365 = sor.u32 256, 48
    %366 = vbcast.lane.b32.xlu0 %v355, %s365
    %v367 = vpop.permute.xlu0 %366
    %s369 = sor.u32 256, 56
    %370 = vbcast.lane.b32.xlu0 %v355, %s369
    %v371 = vpop.permute.xlu0 %370
    %v372 = vlaneseq
    %v373 = vshrl.u32 %v372, 7
    %v374 = vsub.s32 5, %v373
    %v375 = vrot.slane %v242, %v374
    %s377 = sor.u32 256, 32
    %378 = vbcast.lane.b32.xlu0 %v375, %s377
    %v379 = vpop.permute.xlu0 %378
    %s381 = sor.u32 256, 40
    %382 = vbcast.lane.b32.xlu0 %v375, %s381
    %v383 = vpop.permute.xlu0 %382
    %s385 = sor.u32 256, 48
    %386 = vbcast.lane.b32.xlu0 %v375, %s385
    %v387 = vpop.permute.xlu0 %386
    %s389 = sor.u32 256, 56
    %390 = vbcast.lane.b32.xlu0 %v375, %s389
    %v391 = vpop.permute.xlu0 %390
    %v392 = vlaneseq
    %v393 = vshrl.u32 %v392, 7
    %v394 = vsub.s32 6, %v393
    %v395 = vrot.slane %v242, %v394
    %s397 = sor.u32 256, 32
    %398 = vbcast.lane.b32.xlu0 %v395, %s397
    %v399 = vpop.permute.xlu0 %398
    %s401 = sor.u32 256, 40
    %402 = vbcast.lane.b32.xlu0 %v395, %s401
    %v403 = vpop.permute.xlu0 %402
    %s405 = sor.u32 256, 48
    %406 = vbcast.lane.b32.xlu0 %v395, %s405
    %v407 = vpop.permute.xlu0 %406
    %s409 = sor.u32 256, 56
    %410 = vbcast.lane.b32.xlu0 %v395, %s409
    %v411 = vpop.permute.xlu0 %410
    %v412 = vlaneseq
    %v413 = vshrl.u32 %v412, 7
    %v414 = vsub.s32 7, %v413
    %v415 = vrot.slane %v242, %v414
    %s417 = sor.u32 256, 32
    %418 = vbcast.lane.b32.xlu0 %v415, %s417
    %v419 = vpop.permute.xlu0 %418
    %s421 = sor.u32 256, 40
    %422 = vbcast.lane.b32.xlu0 %v415, %s421
    %v423 = vpop.permute.xlu0 %422
    %s425 = sor.u32 256, 48
    %426 = vbcast.lane.b32.xlu0 %v415, %s425
    %v427 = vpop.permute.xlu0 %426
    %s429 = sor.u32 256, 56
    %430 = vbcast.lane.b32.xlu0 %v415, %s429
    %v431 = vpop.permute.xlu0 %430
    %v432 = vmul.f32 %v279, %v199
    %v433 = vmul.f32 %v283, %v200
    %v434 = vmul.f32 %v287, %v201
    %v435 = vmul.f32 %v291, %v202
    %v436 = vmul.f32 %v299, %v203
    %v437 = vmul.f32 %v303, %v204
    %v438 = vmul.f32 %v307, %v205
    %v439 = vmul.f32 %v311, %v206
    %v440 = vmul.f32 %v319, %v207
    %v441 = vmul.f32 %v323, %v208
    %v442 = vmul.f32 %v327, %v209
    %v443 = vmul.f32 %v331, %v210
    %v444 = vmul.f32 %v339, %v211
    %v445 = vmul.f32 %v343, %v212
    %v446 = vmul.f32 %v347, %v213
    %v447 = vmul.f32 %v351, %v214
    %v448 = vmul.f32 %v359, %v215
    %v449 = vmul.f32 %v363, %v216
    %v450 = vmul.f32 %v367, %v217
    %v451 = vmul.f32 %v371, %v218
    %v452 = vmul.f32 %v379, %v219
    %v453 = vmul.f32 %v383, %v220
    %v454 = vmul.f32 %v387, %v221
    %v455 = vmul.f32 %v391, %v222
    %v456 = vmul.f32 %v399, %v223
    %v457 = vmul.f32 %v403, %v224
    %v458 = vmul.f32 %v407, %v225
    %v459 = vmul.f32 %v411, %v226
    %v460 = vmul.f32 %v419, %v227
    %v461 = vmul.f32 %v423, %v228
    %v462 = vmul.f32 %v427, %v229
    %v463 = vmul.f32 %v431, %v230
    %465 = vrot.lane.b32.xlu0 %v197, 96
    %v466 = vpop.permute.xlu0 %465
    %v468 = vmul.f32 %v271, %v466
    %v469 = vlaneseq
    %v470 = vshrl.u32 %v469, 7
    %v471 = vsub.s32 0, %v470
    %v472 = vrot.slane %v468, %v471
    %474 = vbcast.lane.b32.xlu0 %v472, 256
    %v475 = vpop.permute.xlu0 %474
    %s477 = sor.u32 256, 8
    %478 = vbcast.lane.b32.xlu0 %v472, %s477
    %v479 = vpop.permute.xlu0 %478
    %s481 = sor.u32 256, 16
    %482 = vbcast.lane.b32.xlu0 %v472, %s481
    %v483 = vpop.permute.xlu0 %482
    %s485 = sor.u32 256, 24
    %486 = vbcast.lane.b32.xlu0 %v472, %s485
    %v487 = vpop.permute.xlu0 %486
    %v488 = vlaneseq
    %v489 = vshrl.u32 %v488, 7
    %v490 = vsub.s32 1, %v489
    %v491 = vrot.slane %v468, %v490
    %493 = vbcast.lane.b32.xlu0 %v491, 256
    %v494 = vpop.permute.xlu0 %493
    %s496 = sor.u32 256, 8
    %497 = vbcast.lane.b32.xlu0 %v491, %s496
    %v498 = vpop.permute.xlu0 %497
    %s500 = sor.u32 256, 16
    %501 = vbcast.lane.b32.xlu0 %v491, %s500
    %v502 = vpop.permute.xlu0 %501
    %s504 = sor.u32 256, 24
    %505 = vbcast.lane.b32.xlu0 %v491, %s504
    %v506 = vpop.permute.xlu0 %505
    %v507 = vlaneseq
    %v508 = vshrl.u32 %v507, 7
    %v509 = vsub.s32 2, %v508
    %v510 = vrot.slane %v468, %v509
    %512 = vbcast.lane.b32.xlu0 %v510, 256
    %v513 = vpop.permute.xlu0 %512
    %s515 = sor.u32 256, 8
    %516 = vbcast.lane.b32.xlu0 %v510, %s515
    %v517 = vpop.permute.xlu0 %516
    %s519 = sor.u32 256, 16
    %520 = vbcast.lane.b32.xlu0 %v510, %s519
    %v521 = vpop.permute.xlu0 %520
    %s523 = sor.u32 256, 24
    %524 = vbcast.lane.b32.xlu0 %v510, %s523
    %v525 = vpop.permute.xlu0 %524
    %v526 = vlaneseq
    %v527 = vshrl.u32 %v526, 7
    %v528 = vsub.s32 3, %v527
    %v529 = vrot.slane %v468, %v528
    %531 = vbcast.lane.b32.xlu0 %v529, 256
    %v532 = vpop.permute.xlu0 %531
    %s534 = sor.u32 256, 8
    %535 = vbcast.lane.b32.xlu0 %v529, %s534
    %v536 = vpop.permute.xlu0 %535
    %s538 = sor.u32 256, 16
    %539 = vbcast.lane.b32.xlu0 %v529, %s538
    %v540 = vpop.permute.xlu0 %539
    %s542 = sor.u32 256, 24
    %543 = vbcast.lane.b32.xlu0 %v529, %s542
    %v544 = vpop.permute.xlu0 %543
    %v545 = vlaneseq
    %v546 = vshrl.u32 %v545, 7
    %v547 = vsub.s32 4, %v546
    %v548 = vrot.slane %v468, %v547
    %550 = vbcast.lane.b32.xlu0 %v548, 256
    %v551 = vpop.permute.xlu0 %550
    %s553 = sor.u32 256, 8
    %554 = vbcast.lane.b32.xlu0 %v548, %s553
    %v555 = vpop.permute.xlu0 %554
    %s557 = sor.u32 256, 16
    %558 = vbcast.lane.b32.xlu0 %v548, %s557
    %v559 = vpop.permute.xlu0 %558
    %s561 = sor.u32 256, 24
    %562 = vbcast.lane.b32.xlu0 %v548, %s561
    %v563 = vpop.permute.xlu0 %562
    %v564 = vlaneseq
    %v565 = vshrl.u32 %v564, 7
    %v566 = vsub.s32 5, %v565
    %v567 = vrot.slane %v468, %v566
    %569 = vbcast.lane.b32.xlu0 %v567, 256
    %v570 = vpop.permute.xlu0 %569
    %s572 = sor.u32 256, 8
    %573 = vbcast.lane.b32.xlu0 %v567, %s572
    %v574 = vpop.permute.xlu0 %573
    %s576 = sor.u32 256, 16
    %577 = vbcast.lane.b32.xlu0 %v567, %s576
    %v578 = vpop.permute.xlu0 %577
    %s580 = sor.u32 256, 24
    %581 = vbcast.lane.b32.xlu0 %v567, %s580
    %v582 = vpop.permute.xlu0 %581
    %v583 = vlaneseq
    %v584 = vshrl.u32 %v583, 7
    %v585 = vsub.s32 6, %v584
    %v586 = vrot.slane %v468, %v585
    %588 = vbcast.lane.b32.xlu0 %v586, 256
    %v589 = vpop.permute.xlu0 %588
    %s591 = sor.u32 256, 8
    %592 = vbcast.lane.b32.xlu0 %v586, %s591
    %v593 = vpop.permute.xlu0 %592
    %s595 = sor.u32 256, 16
    %596 = vbcast.lane.b32.xlu0 %v586, %s595
    %v597 = vpop.permute.xlu0 %596
    %s599 = sor.u32 256, 24
    %600 = vbcast.lane.b32.xlu0 %v586, %s599
    %v601 = vpop.permute.xlu0 %600
    %v602 = vlaneseq
    %v603 = vshrl.u32 %v602, 7
    %v604 = vsub.s32 7, %v603
    %v605 = vrot.slane %v468, %v604
    %607 = vbcast.lane.b32.xlu0 %v605, 256
    %v608 = vpop.permute.xlu0 %607
    %s610 = sor.u32 256, 8
    %611 = vbcast.lane.b32.xlu0 %v605, %s610
    %v612 = vpop.permute.xlu0 %611
    %s614 = sor.u32 256, 16
    %615 = vbcast.lane.b32.xlu0 %v605, %s614
    %v616 = vpop.permute.xlu0 %615
    %s618 = sor.u32 256, 24
    %619 = vbcast.lane.b32.xlu0 %v605, %s618
    %v620 = vpop.permute.xlu0 %619
    %v621 = vcombine.high %v197, %v197
    %v623 = vunpack.c.l.s4 1966171168
    %v624 = vunpack.c.0.s8 %v623
    %v625 = vlaneseq
    %v626 = vshrl.u32 %v625, 7
    %v627 = vsub.s32 %v624, %v626
    %v628 = vrot.slane %v197, %v627
    %v630 = vunpack.c.l.s4 1966171168
    %v631 = vunpack.c.0.s8 %v630
    %v632 = vlaneseq
    %v633 = vshrl.u32 %v632, 7
    %v634 = vsub.s32 %v631, %v633
    %v635 = vrot.slane %v621, %v634
    %v636 = vcombine.high %v628, %v628
    %v637 = vcombine.high %v635, %v635
    %v639 = vunpack.c.l.s4 1966171168
    %v640 = vunpack.c.0.s8 %v639
    %v641 = vlaneseq
    %v642 = vshrl.u32 %v641, 7
    %v643 = vsub.s32 %v640, %v642
    %v644 = vrot.slane %v628, %v643
    %v646 = vunpack.c.l.s4 1966171168
    %v647 = vunpack.c.0.s8 %v646
    %v648 = vlaneseq
    %v649 = vshrl.u32 %v648, 7
    %v650 = vsub.s32 %v647, %v649
    %v651 = vrot.slane %v635, %v650
    %v653 = vunpack.c.l.s4 1966171168
    %v654 = vunpack.c.0.s8 %v653
    %v655 = vlaneseq
    %v656 = vshrl.u32 %v655, 7
    %v657 = vsub.s32 %v654, %v656
    %v658 = vrot.slane %v636, %v657
    %v660 = vunpack.c.l.s4 1966171168
    %v661 = vunpack.c.0.s8 %v660
    %v662 = vlaneseq
    %v663 = vshrl.u32 %v662, 7
    %v664 = vsub.s32 %v661, %v663
    %v665 = vrot.slane %v637, %v664
    %v666 = vcombine.high %v644, %v644
    %v667 = vcombine.high %v651, %v651
    %v668 = vcombine.high %v658, %v658
    %v669 = vcombine.high %v665, %v665
    %v670 = vlaneseq
    %v671 = vshrl.u32 %v670, 7
    %v672 = vsub.s32 0, %v671
    %v673 = vrot.slane %v644, %v672
    %v674 = vlaneseq
    %v675 = vshrl.u32 %v674, 7
    %v676 = vsub.s32 0, %v675
    %v677 = vrot.slane %v658, %v676
    %v678 = vlaneseq
    %v679 = vshrl.u32 %v678, 7
    %v680 = vsub.s32 0, %v679
    %v681 = vrot.slane %v666, %v680
    %v682 = vlaneseq
    %v683 = vshrl.u32 %v682, 7
    %v684 = vsub.s32 0, %v683
    %v685 = vrot.slane %v668, %v684
    %v686 = vlaneseq
    %v687 = vshrl.u32 %v686, 7
    %v688 = vsub.s32 0, %v687
    %v689 = vrot.slane %v651, %v688
    %v690 = vlaneseq
    %v691 = vshrl.u32 %v690, 7
    %v692 = vsub.s32 0, %v691
    %v693 = vrot.slane %v665, %v692
    %v694 = vlaneseq
    %v695 = vshrl.u32 %v694, 7
    %v696 = vsub.s32 0, %v695
    %v697 = vrot.slane %v667, %v696
    %v698 = vlaneseq
    %v699 = vshrl.u32 %v698, 7
    %v700 = vsub.s32 0, %v699
    %v701 = vrot.slane %v669, %v700
    %v710 = vmul.f32 %v475, %v673
    %v711 = vmul.f32 %v479, %v673
    %v712 = vmul.f32 %v483, %v673
    %v713 = vmul.f32 %v487, %v673
    %v714 = vmul.f32 %v494, %v677
    %v715 = vmul.f32 %v498, %v677
    %v716 = vmul.f32 %v502, %v677
    %v717 = vmul.f32 %v506, %v677
    %v718 = vmul.f32 %v513, %v681
    %v719 = vmul.f32 %v517, %v681
    %v720 = vmul.f32 %v521, %v681
    %v721 = vmul.f32 %v525, %v681
    %v722 = vmul.f32 %v532, %v685
    %v723 = vmul.f32 %v536, %v685
    %v724 = vmul.f32 %v540, %v685
    %v725 = vmul.f32 %v544, %v685
    %v726 = vmul.f32 %v551, %v689
    %v727 = vmul.f32 %v555, %v689
    %v728 = vmul.f32 %v559, %v689
    %v729 = vmul.f32 %v563, %v689
    %v730 = vmul.f32 %v570, %v693
    %v731 = vmul.f32 %v574, %v693
    %v732 = vmul.f32 %v578, %v693
    %v733 = vmul.f32 %v582, %v693
    %v734 = vmul.f32 %v589, %v697
    %v735 = vmul.f32 %v593, %v697
    %v736 = vmul.f32 %v597, %v697
    %v737 = vmul.f32 %v601, %v697
    %v738 = vmul.f32 %v608, %v701
    %v739 = vmul.f32 %v612, %v701
    %v740 = vmul.f32 %v616, %v701
    %v741 = vmul.f32 %v620, %v701
    %v742 = vadd.f32 %v432, %v710
    %v743 = vadd.f32 %v433, %v711
    %v744 = vadd.f32 %v434, %v712
    %v745 = vadd.f32 %v435, %v713
    %v746 = vadd.f32 %v436, %v714
    %v747 = vadd.f32 %v437, %v715
    %v748 = vadd.f32 %v438, %v716
    %v749 = vadd.f32 %v439, %v717
    %v750 = vadd.f32 %v440, %v718
    %v751 = vadd.f32 %v441, %v719
    %v752 = vadd.f32 %v442, %v720
    %v753 = vadd.f32 %v443, %v721
    %v754 = vadd.f32 %v444, %v722
    %v755 = vadd.f32 %v445, %v723
    %v756 = vadd.f32 %v446, %v724
    %v757 = vadd.f32 %v447, %v725
    %v758 = vadd.f32 %v448, %v726
    %v759 = vadd.f32 %v449, %v727
    %v760 = vadd.f32 %v450, %v728
    %v761 = vadd.f32 %v451, %v729
    %v762 = vadd.f32 %v452, %v730
    %v763 = vadd.f32 %v453, %v731
    %v764 = vadd.f32 %v454, %v732
    %v765 = vadd.f32 %v455, %v733
    %v766 = vadd.f32 %v456, %v734
    %v767 = vadd.f32 %v457, %v735
    %v768 = vadd.f32 %v458, %v736
    %v769 = vadd.f32 %v459, %v737
    %v770 = vadd.f32 %v460, %v738
    %v771 = vadd.f32 %v461, %v739
    %v772 = vadd.f32 %v462, %v740
    %v773 = vadd.f32 %v463, %v741
    %775 = vrot.lane.b32.xlu0 %v231, 32
    %v776 = vpop.permute.xlu0 %775
    %v778 = vmul.f32 %v242, %v776
    %v779 = vmul.f32 %v271, %v197
    %781 = vrot.lane.b32.xlu0 %v779, 32
    %v782 = vpop.permute.xlu0 %781
    %v784 = vadd.f32 %v778, %v782
    %786 = vrot.lane.b32.xlu0 %v195, 64
    %v787 = vpop.permute.xlu0 %786
    %v789 = vmul.f32 %v784, %v787
    %791 = vrot.lane.b32.xlu0 %v789, 96
    %v792 = vpop.permute.xlu0 %791
    %v794 = vsel %vm85, %v792, 0.0
    %795 = vadd.xlane.f32.xlu0 %v794
    %v796 = vpop.xlane.xlu0 %795
    %v797 = vand.u32 2147483647, %v796
    %v798 = vmax.f32 %v797, 1.0
    %v799 = vcombine.high %v195, %v195
    %v801 = vunpack.c.l.s4 1966171168
    %v802 = vunpack.c.0.s8 %v801
    %v803 = vlaneseq
    %v804 = vshrl.u32 %v803, 7
    %v805 = vsub.s32 %v802, %v804
    %v806 = vrot.slane %v195, %v805
    %v808 = vunpack.c.l.s4 1966171168
    %v809 = vunpack.c.0.s8 %v808
    %v810 = vlaneseq
    %v811 = vshrl.u32 %v810, 7
    %v812 = vsub.s32 %v809, %v811
    %v813 = vrot.slane %v799, %v812
    %v814 = vcombine.high %v806, %v806
    %v815 = vcombine.high %v813, %v813
    %v817 = vunpack.c.l.s4 1966171168
    %v818 = vunpack.c.0.s8 %v817
    %v819 = vlaneseq
    %v820 = vshrl.u32 %v819, 7
    %v821 = vsub.s32 %v818, %v820
    %v822 = vrot.slane %v806, %v821
    %v824 = vunpack.c.l.s4 1966171168
    %v825 = vunpack.c.0.s8 %v824
    %v826 = vlaneseq
    %v827 = vshrl.u32 %v826, 7
    %v828 = vsub.s32 %v825, %v827
    %v829 = vrot.slane %v813, %v828
    %v831 = vunpack.c.l.s4 1966171168
    %v832 = vunpack.c.0.s8 %v831
    %v833 = vlaneseq
    %v834 = vshrl.u32 %v833, 7
    %v835 = vsub.s32 %v832, %v834
    %v836 = vrot.slane %v814, %v835
    %v838 = vunpack.c.l.s4 1966171168
    %v839 = vunpack.c.0.s8 %v838
    %v840 = vlaneseq
    %v841 = vshrl.u32 %v840, 7
    %v842 = vsub.s32 %v839, %v841
    %v843 = vrot.slane %v815, %v842
    %v844 = vcombine.high %v822, %v822
    %v845 = vcombine.high %v829, %v829
    %v846 = vcombine.high %v836, %v836
    %v847 = vcombine.high %v843, %v843
    %v848 = vlaneseq
    %v849 = vshrl.u32 %v848, 7
    %v850 = vsub.s32 0, %v849
    %v851 = vrot.slane %v822, %v850
    %v852 = vlaneseq
    %v853 = vshrl.u32 %v852, 7
    %v854 = vsub.s32 0, %v853
    %v855 = vrot.slane %v836, %v854
    %v856 = vlaneseq
    %v857 = vshrl.u32 %v856, 7
    %v858 = vsub.s32 0, %v857
    %v859 = vrot.slane %v844, %v858
    %v860 = vlaneseq
    %v861 = vshrl.u32 %v860, 7
    %v862 = vsub.s32 0, %v861
    %v863 = vrot.slane %v846, %v862
    %v864 = vlaneseq
    %v865 = vshrl.u32 %v864, 7
    %v866 = vsub.s32 0, %v865
    %v867 = vrot.slane %v829, %v866
    %v868 = vlaneseq
    %v869 = vshrl.u32 %v868, 7
    %v870 = vsub.s32 0, %v869
    %v871 = vrot.slane %v843, %v870
    %v872 = vlaneseq
    %v873 = vshrl.u32 %v872, 7
    %v874 = vsub.s32 0, %v873
    %v875 = vrot.slane %v845, %v874
    %v876 = vlaneseq
    %v877 = vshrl.u32 %v876, 7
    %v878 = vsub.s32 0, %v877
    %v879 = vrot.slane %v847, %v878
    %880 = vrot.lane.b32.xlu0 %v851, 32
    %v881 = vpop.permute.xlu0 %880
    %882 = vrot.lane.b32.xlu0 %v855, 32
    %v883 = vpop.permute.xlu0 %882
    %884 = vrot.lane.b32.xlu0 %v859, 32
    %v885 = vpop.permute.xlu0 %884
    %886 = vrot.lane.b32.xlu0 %v863, 32
    %v887 = vpop.permute.xlu0 %886
    %888 = vrot.lane.b32.xlu0 %v867, 32
    %v889 = vpop.permute.xlu0 %888
    %890 = vrot.lane.b32.xlu0 %v871, 32
    %v891 = vpop.permute.xlu0 %890
    %892 = vrot.lane.b32.xlu0 %v875, 32
    %v893 = vpop.permute.xlu0 %892
    %894 = vrot.lane.b32.xlu0 %v879, 32
    %v895 = vpop.permute.xlu0 %894
    %v904 = vmul.f32 %v742, %v881
    %v905 = vmul.f32 %v743, %v881
    %v906 = vmul.f32 %v744, %v881
    %v907 = vmul.f32 %v745, %v881
    %v908 = vmul.f32 %v746, %v883
    %v909 = vmul.f32 %v747, %v883
    %v910 = vmul.f32 %v748, %v883
    %v911 = vmul.f32 %v749, %v883
    %v912 = vmul.f32 %v750, %v885
    %v913 = vmul.f32 %v751, %v885
    %v914 = vmul.f32 %v752, %v885
    %v915 = vmul.f32 %v753, %v885
    %v916 = vmul.f32 %v754, %v887
    %v917 = vmul.f32 %v755, %v887
    %v918 = vmul.f32 %v756, %v887
    %v919 = vmul.f32 %v757, %v887
    %v920 = vmul.f32 %v758, %v889
    %v921 = vmul.f32 %v759, %v889
    %v922 = vmul.f32 %v760, %v889
    %v923 = vmul.f32 %v761, %v889
    %v924 = vmul.f32 %v762, %v891
    %v925 = vmul.f32 %v763, %v891
    %v926 = vmul.f32 %v764, %v891
    %v927 = vmul.f32 %v765, %v891
    %v928 = vmul.f32 %v766, %v893
    %v929 = vmul.f32 %v767, %v893
    %v930 = vmul.f32 %v768, %v893
    %v931 = vmul.f32 %v769, %v893
    %v932 = vmul.f32 %v770, %v895
    %v933 = vmul.f32 %v771, %v895
    %v934 = vmul.f32 %v772, %v895
    %v935 = vmul.f32 %v773, %v895
    %v936 = vsel %vm85, %v904, 0.0
    %937 = vadd.xlane.f32.xlu0 %v936
    %v938 = vpop.xlane.xlu0 %937
    %v939 = vsel %vm85, %v905, 0.0
    %940 = vadd.xlane.f32.xlu0 %v939
    %v941 = vpop.xlane.xlu0 %940
    %v942 = vsel %vm85, %v906, 0.0
    %943 = vadd.xlane.f32.xlu0 %v942
    %v944 = vpop.xlane.xlu0 %943
    %v945 = vsel %vm85, %v907, 0.0
    %946 = vadd.xlane.f32.xlu0 %v945
    %v947 = vpop.xlane.xlu0 %946
    %v948 = vsel %vm85, %v908, 0.0
    %949 = vadd.xlane.f32.xlu0 %v948
    %v950 = vpop.xlane.xlu0 %949
    %v951 = vsel %vm85, %v909, 0.0
    %952 = vadd.xlane.f32.xlu0 %v951
    %v953 = vpop.xlane.xlu0 %952
    %v954 = vsel %vm85, %v910, 0.0
    %955 = vadd.xlane.f32.xlu0 %v954
    %v956 = vpop.xlane.xlu0 %955
    %v957 = vsel %vm85, %v911, 0.0
    %958 = vadd.xlane.f32.xlu0 %v957
    %v959 = vpop.xlane.xlu0 %958
    %v960 = vsel %vm85, %v912, 0.0
    %961 = vadd.xlane.f32.xlu0 %v960
    %v962 = vpop.xlane.xlu0 %961
    %v963 = vsel %vm85, %v913, 0.0
    %964 = vadd.xlane.f32.xlu0 %v963
    %v965 = vpop.xlane.xlu0 %964
    %v966 = vsel %vm85, %v914, 0.0
    %967 = vadd.xlane.f32.xlu0 %v966
    %v968 = vpop.xlane.xlu0 %967
    %v969 = vsel %vm85, %v915, 0.0
    %970 = vadd.xlane.f32.xlu0 %v969
    %v971 = vpop.xlane.xlu0 %970
    %v972 = vsel %vm85, %v916, 0.0
    %973 = vadd.xlane.f32.xlu0 %v972
    %v974 = vpop.xlane.xlu0 %973
    %v975 = vsel %vm85, %v917, 0.0
    %976 = vadd.xlane.f32.xlu0 %v975
    %v977 = vpop.xlane.xlu0 %976
    %v978 = vsel %vm85, %v918, 0.0
    %979 = vadd.xlane.f32.xlu0 %v978
    %v980 = vpop.xlane.xlu0 %979
    %v981 = vsel %vm85, %v919, 0.0
    %982 = vadd.xlane.f32.xlu0 %v981
    %v983 = vpop.xlane.xlu0 %982
    %v984 = vsel %vm85, %v920, 0.0
    %985 = vadd.xlane.f32.xlu0 %v984
    %v986 = vpop.xlane.xlu0 %985
    %v987 = vsel %vm85, %v921, 0.0
    %988 = vadd.xlane.f32.xlu0 %v987
    %v989 = vpop.xlane.xlu0 %988
    %v990 = vsel %vm85, %v922, 0.0
    %991 = vadd.xlane.f32.xlu0 %v990
    %v992 = vpop.xlane.xlu0 %991
    %v993 = vsel %vm85, %v923, 0.0
    %994 = vadd.xlane.f32.xlu0 %v993
    %v995 = vpop.xlane.xlu0 %994
    %v996 = vsel %vm85, %v924, 0.0
    %997 = vadd.xlane.f32.xlu0 %v996
    %v998 = vpop.xlane.xlu0 %997
    %v999 = vsel %vm85, %v925, 0.0
    %1000 = vadd.xlane.f32.xlu0 %v999
    %v1001 = vpop.xlane.xlu0 %1000
    %v1002 = vsel %vm85, %v926, 0.0
    %1003 = vadd.xlane.f32.xlu0 %v1002
    %v1004 = vpop.xlane.xlu0 %1003
    %v1005 = vsel %vm85, %v927, 0.0
    %1006 = vadd.xlane.f32.xlu0 %v1005
    %v1007 = vpop.xlane.xlu0 %1006
    %v1008 = vsel %vm85, %v928, 0.0
    %1009 = vadd.xlane.f32.xlu0 %v1008
    %v1010 = vpop.xlane.xlu0 %1009
    %v1011 = vsel %vm85, %v929, 0.0
    %1012 = vadd.xlane.f32.xlu0 %v1011
    %v1013 = vpop.xlane.xlu0 %1012
    %v1014 = vsel %vm85, %v930, 0.0
    %1015 = vadd.xlane.f32.xlu0 %v1014
    %v1016 = vpop.xlane.xlu0 %1015
    %v1017 = vsel %vm85, %v931, 0.0
    %1018 = vadd.xlane.f32.xlu0 %v1017
    %v1019 = vpop.xlane.xlu0 %1018
    %v1020 = vsel %vm85, %v932, 0.0
    %1021 = vadd.xlane.f32.xlu0 %v1020
    %v1022 = vpop.xlane.xlu0 %1021
    %v1023 = vsel %vm85, %v933, 0.0
    %1024 = vadd.xlane.f32.xlu0 %v1023
    %v1025 = vpop.xlane.xlu0 %1024
    %v1026 = vsel %vm85, %v934, 0.0
    %1027 = vadd.xlane.f32.xlu0 %v1026
    %v1028 = vpop.xlane.xlu0 %1027
    %v1029 = vsel %vm85, %v935, 0.0
    %1030 = vadd.xlane.f32.xlu0 %v1029
    %v1031 = vpop.xlane.xlu0 %1030
    %v1032 = vrcp.pop %v798
    %v1034 = vlaneseq
    %v1035 = vshrl.u32 %v1034, 7
    %v1036 = vsub.s32 0, %v1035
    %v1037 = vrot.slane %v1032, %v1036
    %v1038 = vlaneseq
    %v1039 = vshrl.u32 %v1038, 7
    %v1040 = vsub.s32 1, %v1039
    %v1041 = vrot.slane %v1032, %v1040
    %v1042 = vlaneseq
    %v1043 = vshrl.u32 %v1042, 7
    %v1044 = vsub.s32 2, %v1043
    %v1045 = vrot.slane %v1032, %v1044
    %v1046 = vlaneseq
    %v1047 = vshrl.u32 %v1046, 7
    %v1048 = vsub.s32 3, %v1047
    %v1049 = vrot.slane %v1032, %v1048
    %v1050 = vlaneseq
    %v1051 = vshrl.u32 %v1050, 7
    %v1052 = vsub.s32 4, %v1051
    %v1053 = vrot.slane %v1032, %v1052
    %v1054 = vlaneseq
    %v1055 = vshrl.u32 %v1054, 7
    %v1056 = vsub.s32 5, %v1055
    %v1057 = vrot.slane %v1032, %v1056
    %v1058 = vlaneseq
    %v1059 = vshrl.u32 %v1058, 7
    %v1060 = vsub.s32 6, %v1059
    %v1061 = vrot.slane %v1032, %v1060
    %v1062 = vlaneseq
    %v1063 = vshrl.u32 %v1062, 7
    %v1064 = vsub.s32 7, %v1063
    %v1065 = vrot.slane %v1032, %v1064
    %v1074 = vmul.f32 %v938, %v1037
    %v1075 = vmul.f32 %v941, %v1037
    %v1076 = vmul.f32 %v944, %v1037
    %v1077 = vmul.f32 %v947, %v1037
    %v1078 = vmul.f32 %v950, %v1041
    %v1079 = vmul.f32 %v953, %v1041
    %v1080 = vmul.f32 %v956, %v1041
    %v1081 = vmul.f32 %v959, %v1041
    %v1082 = vmul.f32 %v962, %v1045
    %v1083 = vmul.f32 %v965, %v1045
    %v1084 = vmul.f32 %v968, %v1045
    %v1085 = vmul.f32 %v971, %v1045
    %v1086 = vmul.f32 %v974, %v1049
    %v1087 = vmul.f32 %v977, %v1049
    %v1088 = vmul.f32 %v980, %v1049
    %v1089 = vmul.f32 %v983, %v1049
    %v1090 = vmul.f32 %v986, %v1053
    %v1091 = vmul.f32 %v989, %v1053
    %v1092 = vmul.f32 %v992, %v1053
    %v1093 = vmul.f32 %v995, %v1053
    %v1094 = vmul.f32 %v998, %v1057
    %v1095 = vmul.f32 %v1001, %v1057
    %v1096 = vmul.f32 %v1004, %v1057
    %v1097 = vmul.f32 %v1007, %v1057
    %v1098 = vmul.f32 %v1010, %v1061
    %v1099 = vmul.f32 %v1013, %v1061
    %v1100 = vmul.f32 %v1016, %v1061
    %v1101 = vmul.f32 %v1019, %v1061
    %v1102 = vmul.f32 %v1022, %v1065
    %v1103 = vmul.f32 %v1025, %v1065
    %v1104 = vmul.f32 %v1028, %v1065
    %v1105 = vmul.f32 %v1031, %v1065
    %1138 = vset.pattern.permute.xlu0 0
    %1139 = vperm.xlu0 %1138, %v1074
    %v1140 = vpop.permute.xlu0 %1139
    %1141 = vset.pattern.permute.xlu0 0
    %1142 = vperm.xlu0 %1141, %v1075
    %v1143 = vpop.permute.xlu0 %1142
    %1144 = vset.pattern.permute.xlu0 0
    %1145 = vperm.xlu0 %1144, %v1076
    %v1146 = vpop.permute.xlu0 %1145
    %1147 = vset.pattern.permute.xlu0 0
    %1148 = vperm.xlu0 %1147, %v1077
    %v1149 = vpop.permute.xlu0 %1148
    %1150 = vset.pattern.permute.xlu0 0
    %1151 = vperm.xlu0 %1150, %v1078
    %v1152 = vpop.permute.xlu0 %1151
    %1153 = vset.pattern.permute.xlu0 0
    %1154 = vperm.xlu0 %1153, %v1079
    %v1155 = vpop.permute.xlu0 %1154
    %1156 = vset.pattern.permute.xlu0 0
    %1157 = vperm.xlu0 %1156, %v1080
    %v1158 = vpop.permute.xlu0 %1157
    %1159 = vset.pattern.permute.xlu0 0
    %1160 = vperm.xlu0 %1159, %v1081
    %v1161 = vpop.permute.xlu0 %1160
    %1162 = vset.pattern.permute.xlu0 0
    %1163 = vperm.xlu0 %1162, %v1082
    %v1164 = vpop.permute.xlu0 %1163
    %1165 = vset.pattern.permute.xlu0 0
    %1166 = vperm.xlu0 %1165, %v1083
    %v1167 = vpop.permute.xlu0 %1166
    %1168 = vset.pattern.permute.xlu0 0
    %1169 = vperm.xlu0 %1168, %v1084
    %v1170 = vpop.permute.xlu0 %1169
    %1171 = vset.pattern.permute.xlu0 0
    %1172 = vperm.xlu0 %1171, %v1085
    %v1173 = vpop.permute.xlu0 %1172
    %1174 = vset.pattern.permute.xlu0 0
    %1175 = vperm.xlu0 %1174, %v1086
    %v1176 = vpop.permute.xlu0 %1175
    %1177 = vset.pattern.permute.xlu0 0
    %1178 = vperm.xlu0 %1177, %v1087
    %v1179 = vpop.permute.xlu0 %1178
    %1180 = vset.pattern.permute.xlu0 0
    %1181 = vperm.xlu0 %1180, %v1088
    %v1182 = vpop.permute.xlu0 %1181
    %1183 = vset.pattern.permute.xlu0 0
    %1184 = vperm.xlu0 %1183, %v1089
    %v1185 = vpop.permute.xlu0 %1184
    %1186 = vset.pattern.permute.xlu0 0
    %1187 = vperm.xlu0 %1186, %v1090
    %v1188 = vpop.permute.xlu0 %1187
    %1189 = vset.pattern.permute.xlu0 0
    %1190 = vperm.xlu0 %1189, %v1091
    %v1191 = vpop.permute.xlu0 %1190
    %1192 = vset.pattern.permute.xlu0 0
    %1193 = vperm.xlu0 %1192, %v1092
    %v1194 = vpop.permute.xlu0 %1193
    %1195 = vset.pattern.permute.xlu0 0
    %1196 = vperm.xlu0 %1195, %v1093
    %v1197 = vpop.permute.xlu0 %1196
    %1198 = vset.pattern.permute.xlu0 0
    %1199 = vperm.xlu0 %1198, %v1094
    %v1200 = vpop.permute.xlu0 %1199
    %1201 = vset.pattern.permute.xlu0 0
    %1202 = vperm.xlu0 %1201, %v1095
    %v1203 = vpop.permute.xlu0 %1202
    %1204 = vset.pattern.permute.xlu0 0
    %1205 = vperm.xlu0 %1204, %v1096
    %v1206 = vpop.permute.xlu0 %1205
    %1207 = vset.pattern.permute.xlu0 0
    %1208 = vperm.xlu0 %1207, %v1097
    %v1209 = vpop.permute.xlu0 %1208
    %1210 = vset.pattern.permute.xlu0 0
    %1211 = vperm.xlu0 %1210, %v1098
    %v1212 = vpop.permute.xlu0 %1211
    %1213 = vset.pattern.permute.xlu0 0
    %1214 = vperm.xlu0 %1213, %v1099
    %v1215 = vpop.permute.xlu0 %1214
    %1216 = vset.pattern.permute.xlu0 0
    %1217 = vperm.xlu0 %1216, %v1100
    %v1218 = vpop.permute.xlu0 %1217
    %1219 = vset.pattern.permute.xlu0 0
    %1220 = vperm.xlu0 %1219, %v1101
    %v1221 = vpop.permute.xlu0 %1220
    %1222 = vset.pattern.permute.xlu0 0
    %1223 = vperm.xlu0 %1222, %v1102
    %v1224 = vpop.permute.xlu0 %1223
    %1225 = vset.pattern.permute.xlu0 0
    %1226 = vperm.xlu0 %1225, %v1103
    %v1227 = vpop.permute.xlu0 %1226
    %1228 = vset.pattern.permute.xlu0 0
    %1229 = vperm.xlu0 %1228, %v1104
    %v1230 = vpop.permute.xlu0 %1229
    %1231 = vset.pattern.permute.xlu0 0
    %1232 = vperm.xlu0 %1231, %v1105
    %v1233 = vpop.permute.xlu0 %1232
    %v1234 = vlaneseq
    %v1235 = vand.u32 %v1234, 127
    %v1236 = vadd.s32 %v1235, 4294967232
    %v1237 = vlaneseq
    %v1238 = vshrl.u32 %v1237, 7
    %v1239 = vsub.s32 %v1236, %v1238
    %v1240 = vrot.slane %v1140, %v1239
    %v1241 = vadd.s32 %v1235, 4294967224
    %v1242 = vlaneseq
    %v1243 = vshrl.u32 %v1242, 7
    %v1244 = vsub.s32 %v1241, %v1243
    %v1245 = vrot.slane %v1143, %v1244
    %vm1246 = vcmask 654912
    %v1247 = vsel %vm1246, %v1245, %v1240
    %v1248 = vadd.s32 %v1235, 4294967216
    %v1249 = vlaneseq
    %v1250 = vshrl.u32 %v1249, 7
    %v1251 = vsub.s32 %v1248, %v1250
    %v1252 = vrot.slane %v1146, %v1251
    %vm1253 = vcmask 720512
    %v1254 = vsel %vm1253, %v1252, %v1247
    %v1255 = vadd.s32 %v1235, 4294967208
    %v1256 = vlaneseq
    %v1257 = vshrl.u32 %v1256, 7
    %v1258 = vsub.s32 %v1255, %v1257
    %v1259 = vrot.slane %v1149, %v1258
    %vm1260 = vcmask 786112
    %v1261 = vsel %vm1260, %v1259, %v1254
    %v1262 = vlaneseq
    %v1263 = vshrl.u32 %v1262, 7
    %v1264 = vsub.s32 %v1236, %v1263
    %v1265 = vrot.slane %v1152, %v1264
    %v1266 = vlaneseq
    %v1267 = vshrl.u32 %v1266, 7
    %v1268 = vsub.s32 %v1241, %v1267
    %v1269 = vrot.slane %v1155, %v1268
    %v1270 = vsel %vm1246, %v1269, %v1265
    %v1271 = vlaneseq
    %v1272 = vshrl.u32 %v1271, 7
    %v1273 = vsub.s32 %v1248, %v1272
    %v1274 = vrot.slane %v1158, %v1273
    %v1275 = vsel %vm1253, %v1274, %v1270
    %v1276 = vlaneseq
    %v1277 = vshrl.u32 %v1276, 7
    %v1278 = vsub.s32 %v1255, %v1277
    %v1279 = vrot.slane %v1161, %v1278
    %v1280 = vsel %vm1260, %v1279, %v1275
    %v1281 = vlaneseq
    %v1282 = vshrl.u32 %v1281, 7
    %v1283 = vsub.s32 %v1236, %v1282
    %v1284 = vrot.slane %v1164, %v1283
    %v1285 = vlaneseq
    %v1286 = vshrl.u32 %v1285, 7
    %v1287 = vsub.s32 %v1241, %v1286
    %v1288 = vrot.slane %v1167, %v1287
    %v1289 = vsel %vm1246, %v1288, %v1284
    %v1290 = vlaneseq
    %v1291 = vshrl.u32 %v1290, 7
    %v1292 = vsub.s32 %v1248, %v1291
    %v1293 = vrot.slane %v1170, %v1292
    %v1294 = vsel %vm1253, %v1293, %v1289
    %v1295 = vlaneseq
    %v1296 = vshrl.u32 %v1295, 7
    %v1297 = vsub.s32 %v1255, %v1296
    %v1298 = vrot.slane %v1173, %v1297
    %v1299 = vsel %vm1260, %v1298, %v1294
    %v1300 = vlaneseq
    %v1301 = vshrl.u32 %v1300, 7
    %v1302 = vsub.s32 %v1236, %v1301
    %v1303 = vrot.slane %v1176, %v1302
    %v1304 = vlaneseq
    %v1305 = vshrl.u32 %v1304, 7
    %v1306 = vsub.s32 %v1241, %v1305
    %v1307 = vrot.slane %v1179, %v1306
    %v1308 = vsel %vm1246, %v1307, %v1303
    %v1309 = vlaneseq
    %v1310 = vshrl.u32 %v1309, 7
    %v1311 = vsub.s32 %v1248, %v1310
    %v1312 = vrot.slane %v1182, %v1311
    %v1313 = vsel %vm1253, %v1312, %v1308
    %v1314 = vlaneseq
    %v1315 = vshrl.u32 %v1314, 7
    %v1316 = vsub.s32 %v1255, %v1315
    %v1317 = vrot.slane %v1185, %v1316
    %v1318 = vsel %vm1260, %v1317, %v1313
    %v1319 = vlaneseq
    %v1320 = vshrl.u32 %v1319, 7
    %v1321 = vsub.s32 %v1236, %v1320
    %v1322 = vrot.slane %v1188, %v1321
    %v1323 = vlaneseq
    %v1324 = vshrl.u32 %v1323, 7
    %v1325 = vsub.s32 %v1241, %v1324
    %v1326 = vrot.slane %v1191, %v1325
    %v1327 = vsel %vm1246, %v1326, %v1322
    %v1328 = vlaneseq
    %v1329 = vshrl.u32 %v1328, 7
    %v1330 = vsub.s32 %v1248, %v1329
    %v1331 = vrot.slane %v1194, %v1330
    %v1332 = vsel %vm1253, %v1331, %v1327
    %v1333 = vlaneseq
    %v1334 = vshrl.u32 %v1333, 7
    %v1335 = vsub.s32 %v1255, %v1334
    %v1336 = vrot.slane %v1197, %v1335
    %v1337 = vsel %vm1260, %v1336, %v1332
    %v1338 = vlaneseq
    %v1339 = vshrl.u32 %v1338, 7
    %v1340 = vsub.s32 %v1236, %v1339
    %v1341 = vrot.slane %v1200, %v1340
    %v1342 = vlaneseq
    %v1343 = vshrl.u32 %v1342, 7
    %v1344 = vsub.s32 %v1241, %v1343
    %v1345 = vrot.slane %v1203, %v1344
    %v1346 = vsel %vm1246, %v1345, %v1341
    %v1347 = vlaneseq
    %v1348 = vshrl.u32 %v1347, 7
    %v1349 = vsub.s32 %v1248, %v1348
    %v1350 = vrot.slane %v1206, %v1349
    %v1351 = vsel %vm1253, %v1350, %v1346
    %v1352 = vlaneseq
    %v1353 = vshrl.u32 %v1352, 7
    %v1354 = vsub.s32 %v1255, %v1353
    %v1355 = vrot.slane %v1209, %v1354
    %v1356 = vsel %vm1260, %v1355, %v1351
    %v1357 = vlaneseq
    %v1358 = vshrl.u32 %v1357, 7
    %v1359 = vsub.s32 %v1236, %v1358
    %v1360 = vrot.slane %v1212, %v1359
    %v1361 = vlaneseq
    %v1362 = vshrl.u32 %v1361, 7
    %v1363 = vsub.s32 %v1241, %v1362
    %v1364 = vrot.slane %v1215, %v1363
    %v1365 = vsel %vm1246, %v1364, %v1360
    %v1366 = vlaneseq
    %v1367 = vshrl.u32 %v1366, 7
    %v1368 = vsub.s32 %v1248, %v1367
    %v1369 = vrot.slane %v1218, %v1368
    %v1370 = vsel %vm1253, %v1369, %v1365
    %v1371 = vlaneseq
    %v1372 = vshrl.u32 %v1371, 7
    %v1373 = vsub.s32 %v1255, %v1372
    %v1374 = vrot.slane %v1221, %v1373
    %v1375 = vsel %vm1260, %v1374, %v1370
    %v1376 = vlaneseq
    %v1377 = vshrl.u32 %v1376, 7
    %v1378 = vsub.s32 %v1236, %v1377
    %v1379 = vrot.slane %v1224, %v1378
    %v1380 = vlaneseq
    %v1381 = vshrl.u32 %v1380, 7
    %v1382 = vsub.s32 %v1241, %v1381
    %v1383 = vrot.slane %v1227, %v1382
    %v1384 = vsel %vm1246, %v1383, %v1379
    %v1385 = vlaneseq
    %v1386 = vshrl.u32 %v1385, 7
    %v1387 = vsub.s32 %v1248, %v1386
    %v1388 = vrot.slane %v1230, %v1387
    %v1389 = vsel %vm1253, %v1388, %v1384
    %v1390 = vlaneseq
    %v1391 = vshrl.u32 %v1390, 7
    %v1392 = vsub.s32 %v1255, %v1391
    %v1393 = vrot.slane %v1233, %v1392
    %v1394 = vsel %vm1260, %v1393, %v1389
    %vm1395 = vcmask 1041409
    %v1396 = vsel %vm1395, %v1280, %v1261
    %vm1397 = vcmask 1042434
    %v1398 = vsel %vm1397, %v1299, %v1396
    %vm1399 = vcmask 1043459
    %v1400 = vsel %vm1399, %v1318, %v1398
    %vm1401 = vcmask 1044484
    %v1402 = vsel %vm1401, %v1337, %v1400
    %vm1403 = vcmask 1045509
    %v1404 = vsel %vm1403, %v1356, %v1402
    %vm1405 = vcmask 1046534
    %v1406 = vsel %vm1405, %v1375, %v1404
    %vm1407 = vcmask 1047559
    %v1408 = vsel %vm1407, %v1394, %v1406
    %v1410 = vmul.f32 %v242, %v1408
    %1412 = vrot.lane.b32.xlu0 %v1410, 64
    %v1413 = vpop.permute.xlu0 %1412
    %1415 = vst.msk [vmem:[#allocation8] sm:$0xff] %vm85, %v1413
    %1416 = vst.msk [vmem:[#allocation9] sm:$0xff] %vm85, %v742
    %1417 = vst.msk [vmem:[#allocation9 + $0x8] sm:$0xff] %vm85, %v743
    %1418 = vst.msk [vmem:[#allocation9 + $0x10] sm:$0xff] %vm85, %v744
    %1419 = vst.msk [vmem:[#allocation9 + $0x18] sm:$0xff] %vm85, %v745
    %1420 = vst.msk [vmem:[#allocation9 + $0x20] sm:$0xff] %vm85, %v746
    %1421 = vst.msk [vmem:[#allocation9 + $0x28] sm:$0xff] %vm85, %v747
    %1422 = vst.msk [vmem:[#allocation9 + $0x30] sm:$0xff] %vm85, %v748
    %1423 = vst.msk [vmem:[#allocation9 + $0x38] sm:$0xff] %vm85, %v749
    %1424 = vst.msk [vmem:[#allocation9 + $0x40] sm:$0xff] %vm85, %v750
    %1425 = vst.msk [vmem:[#allocation9 + $0x48] sm:$0xff] %vm85, %v751
    %1426 = vst.msk [vmem:[#allocation9 + $0x50] sm:$0xff] %vm85, %v752
    %1427 = vst.msk [vmem:[#allocation9 + $0x58] sm:$0xff] %vm85, %v753
    %1428 = vst.msk [vmem:[#allocation9 + $0x60] sm:$0xff] %vm85, %v754
    %1429 = vst.msk [vmem:[#allocation9 + $0x68] sm:$0xff] %vm85, %v755
    %1430 = vst.msk [vmem:[#allocation9 + $0x70] sm:$0xff] %vm85, %v756
    %1431 = vst.msk [vmem:[#allocation9 + $0x78] sm:$0xff] %vm85, %v757
    %1432 = vst.msk [vmem:[#allocation9 + $0x80] sm:$0xff] %vm85, %v758
    %1433 = vst.msk [vmem:[#allocation9 + $0x88] sm:$0xff] %vm85, %v759
    %1434 = vst.msk [vmem:[#allocation9 + $0x90] sm:$0xff] %vm85, %v760
    %1435 = vst.msk [vmem:[#allocation9 + $0x98] sm:$0xff] %vm85, %v761
    %1436 = vst.msk [vmem:[#allocation9 + $0xa0] sm:$0xff] %vm85, %v762
    %1437 = vst.msk [vmem:[#allocation9 + $0xa8] sm:$0xff] %vm85, %v763
    %1438 = vst.msk [vmem:[#allocation9 + $0xb0] sm:$0xff] %vm85, %v764
    %1439 = vst.msk [vmem:[#allocation9 + $0xb8] sm:$0xff] %vm85, %v765
    %1440 = vst.msk [vmem:[#allocation9 + $0xc0] sm:$0xff] %vm85, %v766
    %1441 = vst.msk [vmem:[#allocation9 + $0xc8] sm:$0xff] %vm85, %v767
    %1442 = vst.msk [vmem:[#allocation9 + $0xd0] sm:$0xff] %vm85, %v768
    %1443 = vst.msk [vmem:[#allocation9 + $0xd8] sm:$0xff] %vm85, %v769
    %1444 = vst.msk [vmem:[#allocation9 + $0xe0] sm:$0xff] %vm85, %v770
    %1445 = vst.msk [vmem:[#allocation9 + $0xe8] sm:$0xff] %vm85, %v771
    %1446 = vst.msk [vmem:[#allocation9 + $0xf0] sm:$0xff] %vm85, %v772
    %1447 = vst.msk [vmem:[#allocation9 + $0xf8] sm:$0xff] %vm85, %v773
    %1449 = vrot.lane.b32.xlu0 %v784, 96
    %v1450 = vpop.permute.xlu0 %1449
    %1452 = vst.msk [vmem:[#allocation11] sm:$0xff] %vm85, %v1450
    %1453 = vst.msk [vmem:[#allocation12] sm:$0xff] %vm85, %v266
    // Predicated region
    $region46: #{pla_cell.1} parent=1 // pred_check
      _
    $region47: #{pla_cell.1} parent=1 // pred_check_branch
      %1455 = sbr.rel (0) target = $region49
    $region48: #{pla_cell.1} parent=1 // pred_region
      %s1457 = ssub.s32 128, 128
      %1458 = vsyncadd [#allocation4], %s1457
      %s1460 = sshll.u32 [#allocation8], 4
      %s1461 = int_to_ptr.vmem [resolvable:$true] %s1460
      %1463 = dma.vmem_to_hbm [thread:$0]  %s1461, 128, %s8, [#allocation4]
    $region49: #{pla_cell.1} parent=1 // pred_fallthru
      _
    // Predicated region
    $region50: #{pla_cell.1} parent=1 // pred_check
      _
    $region51: #{pla_cell.1} parent=1 // pred_check_branch
      %1465 = sbr.rel (0) target = $region53
    $region52: #{pla_cell.1} parent=1 // pred_region
      %s1467 = ssub.s32 4096, 4096
      %1468 = vsyncadd [#allocation10], %s1467
      %s1469 = sshll.u32 [#allocation9], 4
      %s1470 = int_to_ptr.vmem [resolvable:$true] %s1469
      %1475 = dma.vmem_to_hbm [thread:$0]  %s1470, 4096, %s9, [#allocation10], 128, 128, 8
    $region53: #{pla_cell.1} parent=1 // pred_fallthru
      _
    // Predicated region
    $region54: #{pla_cell.1} parent=1 // pred_check
      _
    $region55: #{pla_cell.1} parent=1 // pred_check_branch
      %1477 = sbr.rel (0) target = $region57
    $region56: #{pla_cell.1} parent=1 // pred_region
      %s1479 = ssub.s32 128, 128
      %1480 = vsyncadd [#allocation10], %s1479
      %s1482 = sshll.u32 [#allocation11], 4
      %s1483 = int_to_ptr.vmem [resolvable:$true] %s1482
      %1485 = dma.vmem_to_hbm [thread:$0]  %s1483, 128, %s10, [#allocation10]
    $region57: #{pla_cell.1} parent=1 // pred_fallthru
      _
    // Predicated region
    $region58: #{pla_cell.1} parent=1 // pred_check
      _
    $region59: #{pla_cell.1} parent=1 // pred_check_branch
      %1487 = sbr.rel (0) target = $region61
    $region60: #{pla_cell.1} parent=1 // pred_region
      %s1489 = ssub.s32 128, 128
      %1490 = vsyncadd [#allocation13], %s1489
      %s1492 = sshll.u32 [#allocation12], 4
      %s1493 = int_to_ptr.vmem [resolvable:$true] %s1492
      %1495 = dma.vmem_to_hbm [thread:$0]  %s1493, 128, %s11, [#allocation13]
    $region61: #{pla_cell.1} parent=1 // pred_fallthru
      _
    // Predicated region
    $region62: #{pla_cell.1} parent=1 // pred_check
      _
    $region63: #{pla_cell.1} parent=1 // pred_check_branch
      %1497 = sbr.rel (0) target = $region65
    $region64: #{pla_cell.1} parent=1 // pred_region
      %1498 = dma.done [#allocation4], 128
    $region65: #{pla_cell.1} parent=1 // pred_fallthru
      _
    // Predicated region
    $region66: #{pla_cell.1} parent=1 // pred_check
      _
    $region67: #{pla_cell.1} parent=1 // pred_check_branch
      %1500 = sbr.rel (0) target = $region69
    $region68: #{pla_cell.1} parent=1 // pred_region
      %1501 = dma.done [#allocation10], 4096
    $region69: #{pla_cell.1} parent=1 // pred_fallthru
      _
    // Predicated region
    $region70: #{pla_cell.1} parent=1 // pred_check
      _
    $region71: #{pla_cell.1} parent=1 // pred_check_branch
      %1503 = sbr.rel (0) target = $region73
    $region72: #{pla_cell.1} parent=1 // pred_region
      %1504 = dma.done [#allocation10], 128
    $region73: #{pla_cell.1} parent=1 // pred_fallthru
      _
    // Predicated region
    $region74: #{pla_cell.1} parent=1 // pred_check
      _
    $region75: #{pla_cell.1} parent=1 // pred_check_branch
      %1506 = sbr.rel (0) target = $region77
    $region76: #{pla_cell.1} parent=1 // pred_region
      %1507 = dma.done [#allocation13], 128
    $region77: #{pla_cell.1} parent=1 // pred_fallthru
      _
    %1508 = vsyncpa [#allocation3], 1
    %1509 = vsyncpa [#allocation6], 1
    %1510 = vsyncpa [#allocation4], 1
    %1511 = vsyncpa [#allocation10], 1
    %1512 = vsyncpa [#allocation13], 1

</llo_original>
